<compile_context>
chip_gen: v6e
topology: v6e:2x2x1
jax: 0.10.0
libtpu: 0.0.40
codegen_flags: <defaults>
</compile_context>

<pallas_src>
import functools

import jax
import jax.numpy as jnp
from jax import lax
from jax.experimental import pallas as pl
from jax.experimental.pallas import tpu as pltpu


def _round_up(a: int, b: int) -> int:
    return ((a + b - 1) // b) * b


def _cdiv(a: int, b: int) -> int:
    return (a + b - 1) // b


def _sublane_granule(dtype) -> int:
    # f32 -> 8 rows, bf16 -> 16 rows, int8/fp8 -> 32 rows.
    return max(8, 32 // jnp.dtype(dtype).itemsize)


def _pad2(a, shape):
    return jnp.pad(a, tuple((0, t - s) for s, t in zip(a.shape, shape)))


def gcn_v_kernel(adj_ref, xk_ref, xd_ref,
                 w1x_ref, w1a_ref, b1_ref,
                 wc1_ref, bc1_ref, prelu_a_ref,
                 wc2_ref, bc2_ref,
                 out_ref, acc_ref, *, last_k_valid):
    k = pl.program_id(1)
    nk = pl.num_programs(1)

    # --- init the aggregation accumulator at the start of each K sweep ---
    @pl.when(k == 0)
    def _():
        acc_ref[...] = jnp.zeros_like(acc_ref)

    def accumulate(a_tile, x_tile):
        acc_ref[...] += jnp.dot(a_tile, x_tile, preferred_element_type=jnp.float32)

    # --- streamed mean-aggregation: acc += adj_tile @ x_tile (f32 accumulation) ---
    if last_k_valid is None:
        accumulate(adj_ref[...], xk_ref[...])
    else:
        # Ragged last K tile: zero out the garbage columns of adj and rows of x
        # beyond the true N before feeding the MXU (edge-block contents past the
        # array extent are unspecified).
        @pl.when(k != nk - 1)
        def _():
            accumulate(adj_ref[...], xk_ref[...])

        @pl.when(k == nk - 1)
        def _():
            a = adj_ref[...]
            xk = xk_ref[...]
            col = lax.broadcasted_iota(jnp.int32, a.shape, 1)
            row = lax.broadcasted_iota(jnp.int32, xk.shape, 0)
            a = jnp.where(col < last_k_valid, a, jnp.zeros_like(a))
            xk = jnp.where(row < last_k_valid, xk, jnp.zeros_like(xk))
            accumulate(a, xk)

    # --- epilogue: GraphConv + classifier1 (PReLU) + classifier2 on last K tile ---
    @pl.when(k == nk - 1)
    def _():
        xd = xd_ref[...].astype(jnp.float32)
        h = jnp.dot(xd, w1x_ref[...], preferred_element_type=jnp.float32)
        h = h + jnp.dot(acc_ref[...], w1a_ref[...], preferred_element_type=jnp.float32)
        h = jnp.maximum(h + b1_ref[...], 0.0)               # relu (dropout=0 -> no-op)

        z = jnp.dot(h, wc1_ref[...], preferred_element_type=jnp.float32) + bc1_ref[...]
        a = prelu_a_ref[...]
        z = jnp.where(z > 0, z, a * z)                       # PReLU(nhid)

        pred = jnp.dot(z, wc2_ref[...], preferred_element_type=jnp.float32) + bc2_ref[...]
        out_ref[...] = pred.astype(out_ref.dtype)


def gcn_v_forward(x, adj, params, dst_num, *, tm=512, tk=2048,
                  min_row_tiles=1, vmem_limit_bytes=None):
    """GCN_V forward.

    x:   (N, D) node features.   adj: (N, N) row-normalized adjacency.
    Pass both already in the streaming dtype you want on the wire (e.g. bf16,
    cast where the adjacency normalization happens) -- the wrapper does NOT
    copy/pad/cast them.  Aggregation accumulates in f32 on the MXU.

    tm / tk:        row / reduction tile sizes (tk rounded up to 128).
    min_row_tiles:  set to 2 on v7x (2 TensorCores/chip) so the "parallel" row
                    axis shards across both cores when dst_num fits one tile.
    Returns pred: (dst_num, nclass) float32.
    """
    N, D = x.shape
    assert adj.shape == (N, N)
    nhid = params["w1_x"].shape[1]
    nclass = params["wc2"].shape[1]

    # ---- tiling (no staging copies of adj / x; ragged tails handled in-kernel) ----
    granule = max(_sublane_granule(adj.dtype), _sublane_granule(x.dtype))
    tm = _round_up(tm, granule)
    tk = _round_up(tk, 128)

    dst_g = _round_up(dst_num, granule)
    TM = min(tm, dst_g)
    if min_row_tiles > 1:
        TM = min(TM, _round_up(_cdiv(dst_g, min_row_tiles), granule))
    TM = max(TM, granule)
    row_tiles = _cdiv(dst_num, TM)
    M_pad = row_tiles * TM

    if N <= tk:
        TK, k_tiles, last_k_valid = N, 1, None            # single full-width K step
    else:
        TK, k_tiles = tk, _cdiv(N, tk)
        rem = N - (k_tiles - 1) * TK
        last_k_valid = None if rem == TK else rem         # mask ragged last K tile

    NH = _round_up(nhid, 128)                             # lane-dense epilogue
    NC = _round_up(nclass, 128)                           # lane-dense output block

    # ---- weights/biases: pad hidden/class dims to 128 lanes (tiny, VMEM-resident) ----
    w1x = _pad2(params["w1_x"].astype(jnp.float32), (D, NH))
    w1a = _pad2(params["w1_agg"].astype(jnp.float32), (D, NH))
    b1 = _pad2(params["b1"].astype(jnp.float32), (1, NH))
    wc1 = _pad2(params["wc1"].astype(jnp.float32), (NH, NH))
    bc1 = _pad2(params["bc1"].astype(jnp.float32), (1, NH))
    pa = _pad2(params["prelu_a"].astype(jnp.float32), (1, NH))
    wc2 = _pad2(params["wc2"].astype(jnp.float32), (NH, NC))
    bc2 = _pad2(params["bc2"].astype(jnp.float32), (1, NC))

    grid = (row_tiles, k_tiles)
    const = lambda i, k: (0, 0)

    def weight_spec(shape, single_buffered):
        # Constant index map -> fetched once; Buffered(1) reclaims the second buffer.
        if single_buffered and hasattr(pl, "Buffered"):
            try:
                return pl.BlockSpec(shape, const, pipeline_mode=pl.Buffered(1))
            except TypeError:            # older jax: no pipeline_mode kwarg
                pass
        return pl.BlockSpec(shape, const)

    adj_b = jnp.dtype(adj.dtype).itemsize
    x_b = jnp.dtype(x.dtype).itemsize

    flops = (2 * M_pad * N * D                        # aggregation
             + 2 * M_pad * D * NH * 2                 # GraphConv (both halves)
             + 2 * M_pad * NH * NH                    # classifier1
             + 2 * M_pad * NH * NC)                   # classifier2
    weight_bytes = int(w1x.nbytes + w1a.nbytes + wc1.nbytes + wc2.nbytes
                       + b1.nbytes + bc1.nbytes + pa.nbytes + bc2.nbytes)
    bytes_accessed = int(M_pad * N * adj_b            # adj rows, read once
                         + row_tiles * N * D * x_b    # x re-streamed per row tile
                         + M_pad * D * x_b            # self-feature rows
                         + weight_bytes
                         + M_pad * NC * 4)            # output

    if vmem_limit_bytes is None:
        blk = 2 * (TM * TK * adj_b + TK * D * x_b + TM * D * x_b + TM * NC * 4)
        acc = TM * D * 4
        vmem_limit_bytes = min(max(2 * (blk + 2 * weight_bytes + acc) + (8 << 20),
                                   32 << 20), 64 << 20)

    def _run(single_buffered):
        in_specs = [
            pl.BlockSpec((TM, TK), lambda i, k: (i, k)),   # adj rows x K chunk
            pl.BlockSpec((TK, D), lambda i, k: (k, 0)),    # x, K chunk (agg operand)
            pl.BlockSpec((TM, D), lambda i, k: (i, 0)),    # x rows (self term)
            weight_spec((D, NH), single_buffered),         # w1_x
            weight_spec((D, NH), single_buffered),         # w1_agg
            weight_spec((1, NH), single_buffered),         # b1
            weight_spec((NH, NH), single_buffered),        # wc1
            weight_spec((1, NH), single_buffered),         # bc1
            weight_spec((1, NH), single_buffered),         # prelu_a
            weight_spec((NH, NC), single_buffered),        # wc2
            weight_spec((1, NC), single_buffered),         # bc2
        ]
        out_spec = pl.BlockSpec((TM, NC), lambda i, k: (i, 0))
        call = pl.pallas_call(
            functools.partial(gcn_v_kernel, last_k_valid=last_k_valid),
            out_shape=jax.ShapeDtypeStruct((M_pad, NC), jnp.float32),
            grid_spec=pltpu.PrefetchScalarGridSpec(
                num_scalar_prefetch=0,
                grid=grid,
                in_specs=in_specs,
                out_specs=out_spec,
                scratch_shapes=[pltpu.VMEM((TM, D), jnp.float32)],   # agg accumulator
            ),
            compiler_params=pltpu.CompilerParams(
                dimension_semantics=("parallel", "arbitrary"),
                vmem_limit_bytes=int(vmem_limit_bytes)),
            cost_estimate=pl.CostEstimate(flops=flops, transcendentals=0,
                                          bytes_accessed=bytes_accessed),
        )
        return call(adj, x, x, w1x, w1a, b1, wc1, bc1, pa, wc2, bc2)

    try:
        pred_pad = _run(True)
    except Exception:
        # This jax/mosaic build rejected pipeline_mode=pl.Buffered(1);
        # retry with default (double-buffered) weight specs.
        pred_pad = _run(False)

    return pred_pad[:dst_num, :nclass]


def init_params(key, feature_dim, nhid, nclass):
    ks = jax.random.split(key, 4)

    def xavier(k, shape):
        fan_in, fan_out = shape
        lim = jnp.sqrt(6.0 / (fan_in + fan_out))
        return jax.random.uniform(k, shape, jnp.float32, -lim, lim)

    # GraphConv weight is (2*feature_dim, nhid) applied to concat([x, agg]);
    # stored split so the kernel needs no concatenate.
    w1 = xavier(ks[0], (2 * feature_dim, nhid))
    return {
        "w1_x": w1[:feature_dim],
        "w1_agg": w1[feature_dim:],
        "b1": jnp.zeros((1, nhid), jnp.float32),
        "wc1": xavier(ks[1], (nhid, nhid)),
        "bc1": jax.random.uniform(ks[2], (1, nhid), jnp.float32, -0.05, 0.05),
        "prelu_a": jnp.full((1, nhid), 0.25, jnp.float32),   # torch PReLU default 0.25
        "wc2": xavier(ks[3], (nhid, nclass)),
        "bc2": jnp.zeros((1, nclass), jnp.float32),
    }


def gcn_v_reference(x, adj, params, dst_num):
    x = x.astype(jnp.float32)
    adj = adj.astype(jnp.float32)
    agg = adj @ x
    cat = jnp.concatenate([x, agg], axis=-1)
    w1 = jnp.concatenate([params["w1_x"], params["w1_agg"]], axis=0)
    h = jnp.maximum(cat @ w1 + params["b1"], 0.0)
    hd = h[:dst_num]
    z = hd @ params["wc1"] + params["bc1"]
    z = jnp.where(z > 0, z, params["prelu_a"] * z)
    return z @ params["wc2"] + params["bc2"]


def _make_inputs(key, N, feature_dim, dtype=jnp.float32):
    k_x, k_adj = jax.random.split(key, 2)
    x = jax.random.normal(k_x, (N, feature_dim), jnp.float32)
    # Row-normalized dense adjacency (mean aggregation over neighbors incl. self).
    raw = (jax.random.uniform(k_adj, (N, N)) < 0.3).astype(jnp.float32)
    raw = raw + jnp.eye(N, dtype=jnp.float32)
    adj = raw / jnp.sum(raw, axis=1, keepdims=True)
    # "Upstream" cast: the normalized adjacency / features are produced directly
    # in the streaming dtype, so the kernel wrapper never re-materializes them.
    return x.astype(dtype), adj.astype(dtype)


if __name__ == "__main__":
    key = jax.random.PRNGKey(0)
    k1, k2, kp1, kp2 = jax.random.split(key, 4)

    # ---- test 1: small shapes, f32 path, single-tile grid ----
    feature_dim, nhid, nclass = 32, 32, 4
    N, dst_num = 16, 8
    x, adj = _make_inputs(k1, N, feature_dim, jnp.float32)
    params = init_params(kp1, feature_dim, nhid, nclass)

    pred = jax.block_until_ready(gcn_v_forward(x, adj, params, dst_num))
    ref = gcn_v_reference(x, adj, params, dst_num)
    assert pred.shape == (dst_num, nclass)
    assert jnp.allclose(pred, ref, atol=1e-4, rtol=1e-4), "mismatch vs reference (f32)"

    # ---- test 2: bf16 streaming, multiple row tiles, ragged last K tile ----
    feature_dim2, nhid2, nclass2 = 48, 64, 4
    N2, dst_num2 = 400, 72
    x2, adj2 = _make_inputs(k2, N2, feature_dim2, jnp.bfloat16)
    params2 = init_params(kp2, feature_dim2, nhid2, nclass2)

    pred2 = jax.block_until_ready(
        gcn_v_forward(x2, adj2, params2, dst_num2, tm=32, tk=128))
    ref2 = gcn_v_reference(x2, adj2, params2, dst_num2)
    assert pred2.shape == (dst_num2, nclass2)
    assert jnp.allclose(pred2, ref2, atol=2e-3, rtol=2e-3), "mismatch vs reference (bf16/tiled)"

    print("KERNEL_OK")
</pallas_src>

<mosaic_0001>
module attributes {stable_mosaic.version = 11 : i64} {
  func.func @gcn_v_kernel(%arg0: i32, %arg1: i32, %arg2: memref<8x16xf32, #tpu.memory_space<vmem>>, %arg3: memref<16x32xf32, #tpu.memory_space<vmem>>, %arg4: memref<8x32xf32, #tpu.memory_space<vmem>>, %arg5: memref<32x128xf32, #tpu.memory_space<vmem>>, %arg6: memref<32x128xf32, #tpu.memory_space<vmem>>, %arg7: memref<1x128xf32, #tpu.memory_space<vmem>>, %arg8: memref<128x128xf32, #tpu.memory_space<vmem>>, %arg9: memref<1x128xf32, #tpu.memory_space<vmem>>, %arg10: memref<1x128xf32, #tpu.memory_space<vmem>>, %arg11: memref<128x128xf32, #tpu.memory_space<vmem>>, %arg12: memref<1x128xf32, #tpu.memory_space<vmem>>, %arg13: memref<8x128xf32, #tpu.memory_space<vmem>>, %arg14: memref<8x32xf32, #tpu.memory_space<vmem>>) attributes {dimension_semantics = [#tpu.dimension_semantics<parallel>, #tpu.dimension_semantics<arbitrary>], iteration_bounds = array<i64: 1, 1>, scalar_prefetch = 0 : i64, scratch_operands = 1 : i64, tpu.core_type = #tpu.core_type<tc>, window_params = [{transform_indices = @transform_0, window_bounds = array<i64: 8, 16>}, {transform_indices = @transform_1, window_bounds = array<i64: 16, 32>}, {transform_indices = @transform_2, window_bounds = array<i64: 8, 32>}, {pipeline_mode = #tpu.pipeline_mode<synchronous>, transform_indices = @transform_3, window_bounds = array<i64: 32, 128>}, {pipeline_mode = #tpu.pipeline_mode<synchronous>, transform_indices = @transform_4, window_bounds = array<i64: 32, 128>}, {pipeline_mode = #tpu.pipeline_mode<synchronous>, transform_indices = @transform_5, window_bounds = array<i64: 1, 128>}, {pipeline_mode = #tpu.pipeline_mode<synchronous>, transform_indices = @transform_6, window_bounds = array<i64: 128, 128>}, {pipeline_mode = #tpu.pipeline_mode<synchronous>, transform_indices = @transform_7, window_bounds = array<i64: 1, 128>}, {pipeline_mode = #tpu.pipeline_mode<synchronous>, transform_indices = @transform_8, window_bounds = array<i64: 1, 128>}, {pipeline_mode = #tpu.pipeline_mode<synchronous>, transform_indices = @transform_9, window_bounds = array<i64: 128, 128>}, {pipeline_mode = #tpu.pipeline_mode<synchronous>, transform_indices = @transform_10, window_bounds = array<i64: 1, 128>}, {transform_indices = @transform_11, window_bounds = array<i64: 8, 128>}]} {
    %c0_i32 = arith.constant 0 : i32
    %0 = arith.cmpi eq, %arg1, %c0_i32 : i32
    %1 = arith.extui %0 : i1 to i32
    %c0_i32_0 = arith.constant 0 : i32
    %2 = arith.cmpi ne, %1, %c0_i32_0 : i32
    scf.if %2 {
      %cst_10 = arith.constant 0.000000e+00 : f32
      %12 = vector.broadcast %cst_10 : f32 to vector<8x32xf32>
      %c0_11 = arith.constant 0 : index
      %c0_12 = arith.constant 0 : index
      %13 = vector.load %arg14[%c0_11, %c0_12] : memref<8x32xf32, #tpu.memory_space<vmem>>, vector<8x32xf32>
      tpu.vector_store %arg14[%c0_11, %c0_12], %12 {strides = array<i32>} : memref<8x32xf32, #tpu.memory_space<vmem>>, vector<8x32xf32>,
    } else {
    }
    %c0 = arith.constant 0 : index
    %c0_1 = arith.constant 0 : index
    %3 = vector.load %arg2[%c0, %c0_1] : memref<8x16xf32, #tpu.memory_space<vmem>>, vector<8x16xf32>
    %c0_2 = arith.constant 0 : index
    %c0_3 = arith.constant 0 : index
    %4 = vector.load %arg3[%c0_2, %c0_3] : memref<16x32xf32, #tpu.memory_space<vmem>>, vector<16x32xf32>
    %c0_4 = arith.constant 0 : index
    %c0_5 = arith.constant 0 : index
    %5 = vector.load %arg14[%c0_4, %c0_5] : memref<8x32xf32, #tpu.memory_space<vmem>>, vector<8x32xf32>
    %cst = arith.constant dense<0.000000e+00> : vector<8x32xf32>
    %6 = tpu.matmul %3, %4, %cst {dimension_numbers = #tpu.dot_dimension_numbers<[1], [0], [0], [1], [0, 0, 1, 1], [], []>} : vector<8x16xf32>, vector<16x32xf32>, vector<8x32xf32> -> vector<8x32xf32>
    %7 = arith.addf %5, %6 : vector<8x32xf32>
    %c0_6 = arith.constant 0 : index
    %c0_7 = arith.constant 0 : index
    %8 = vector.load %arg14[%c0_6, %c0_7] : memref<8x32xf32, #tpu.memory_space<vmem>>, vector<8x32xf32>
    tpu.vector_store %arg14[%c0_6, %c0_7], %7 {strides = array<i32>} : memref<8x32xf32, #tpu.memory_space<vmem>>, vector<8x32xf32>,
    %c0_i32_8 = arith.constant 0 : i32
    %9 = arith.cmpi eq, %arg1, %c0_i32_8 : i32
    %10 = arith.extui %9 : i1 to i32
    %c0_i32_9 = arith.constant 0 : i32
    %11 = arith.cmpi ne, %10, %c0_i32_9 : i32
    scf.if %11 {
      %c0_10 = arith.constant 0 : index
      %c0_11 = arith.constant 0 : index
      %12 = vector.load %arg4[%c0_10, %c0_11] : memref<8x32xf32, #tpu.memory_space<vmem>>, vector<8x32xf32>
      %c0_12 = arith.constant 0 : index
      %c0_13 = arith.constant 0 : index
      %13 = vector.load %arg5[%c0_12, %c0_13] : memref<32x128xf32, #tpu.memory_space<vmem>>, vector<32x128xf32>
      %cst_14 = arith.constant dense<0.000000e+00> : vector<8x128xf32>
      %14 = tpu.matmul %12, %13, %cst_14 {dimension_numbers = #tpu.dot_dimension_numbers<[1], [0], [0], [1], [0, 0, 1, 1], [], []>} : vector<8x32xf32>, vector<32x128xf32>, vector<8x128xf32> -> vector<8x128xf32>
      %c0_15 = arith.constant 0 : index
      %c0_16 = arith.constant 0 : index
      %15 = vector.load %arg14[%c0_15, %c0_16] : memref<8x32xf32, #tpu.memory_space<vmem>>, vector<8x32xf32>
      %c0_17 = arith.constant 0 : index
      %c0_18 = arith.constant 0 : index
      %16 = vector.load %arg6[%c0_17, %c0_18] : memref<32x128xf32, #tpu.memory_space<vmem>>, vector<32x128xf32>
      %cst_19 = arith.constant dense<0.000000e+00> : vector<8x128xf32>
      %17 = tpu.matmul %15, %16, %cst_19 {dimension_numbers = #tpu.dot_dimension_numbers<[1], [0], [0], [1], [0, 0, 1, 1], [], []>} : vector<8x32xf32>, vector<32x128xf32>, vector<8x128xf32> -> vector<8x128xf32>
      %18 = arith.addf %14, %17 : vector<8x128xf32>
      %c0_20 = arith.constant 0 : index
      %c0_21 = arith.constant 0 : index
      %19 = vector.load %arg7[%c0_20, %c0_21] : memref<1x128xf32, #tpu.memory_space<vmem>>, vector<1x128xf32>
      %20 = vector.broadcast %19 : vector<1x128xf32> to vector<8x128xf32>
      %21 = arith.addf %18, %20 : vector<8x128xf32>
      %cst_22 = arith.constant 0.000000e+00 : f32
      %22 = vector.broadcast %cst_22 : f32 to vector<8x128xf32>
      %23 = arith.maximumf %21, %22 : vector<8x128xf32>
      %c0_23 = arith.constant 0 : index
      %c0_24 = arith.constant 0 : index
      %24 = vector.load %arg8[%c0_23, %c0_24] : memref<128x128xf32, #tpu.memory_space<vmem>>, vector<128x128xf32>
      %cst_25 = arith.constant dense<0.000000e+00> : vector<8x128xf32>
      %25 = tpu.matmul %23, %24, %cst_25 {dimension_numbers = #tpu.dot_dimension_numbers<[1], [0], [0], [1], [0, 0, 1, 1], [], []>} : vector<8x128xf32>, vector<128x128xf32>, vector<8x128xf32> -> vector<8x128xf32>
      %c0_26 = arith.constant 0 : index
      %c0_27 = arith.constant 0 : index
      %26 = vector.load %arg9[%c0_26, %c0_27] : memref<1x128xf32, #tpu.memory_space<vmem>>, vector<1x128xf32>
      %27 = vector.broadcast %26 : vector<1x128xf32> to vector<8x128xf32>
      %28 = arith.addf %25, %27 : vector<8x128xf32>
      %c0_28 = arith.constant 0 : index
      %c0_29 = arith.constant 0 : index
      %29 = vector.load %arg10[%c0_28, %c0_29] : memref<1x128xf32, #tpu.memory_space<vmem>>, vector<1x128xf32>
      %cst_30 = arith.constant 0.000000e+00 : f32
      %30 = vector.broadcast %cst_30 : f32 to vector<8x128xf32>
      %31 = arith.cmpf ogt, %28, %30 : vector<8x128xf32>
      %32 = vector.broadcast %29 : vector<1x128xf32> to vector<8x128xf32>
      %33 = arith.mulf %32, %28 : vector<8x128xf32>
      %34 = arith.select %31, %28, %33 : vector<8x128xi1>, vector<8x128xf32>
      %c0_31 = arith.constant 0 : index
      %c0_32 = arith.constant 0 : index
      %35 = vector.load %arg11[%c0_31, %c0_32] : memref<128x128xf32, #tpu.memory_space<vmem>>, vector<128x128xf32>
      %cst_33 = arith.constant dense<0.000000e+00> : vector<8x128xf32>
      %36 = tpu.matmul %34, %35, %cst_33 {dimension_numbers = #tpu.dot_dimension_numbers<[1], [0], [0], [1], [0, 0, 1, 1], [], []>} : vector<8x128xf32>, vector<128x128xf32>, vector<8x128xf32> -> vector<8x128xf32>
      %c0_34 = arith.constant 0 : index
      %c0_35 = arith.constant 0 : index
      %37 = vector.load %arg12[%c0_34, %c0_35] : memref<1x128xf32, #tpu.memory_space<vmem>>, vector<1x128xf32>
      %38 = vector.broadcast %37 : vector<1x128xf32> to vector<8x128xf32>
      %39 = arith.addf %36, %38 : vector<8x128xf32>
      %c0_36 = arith.constant 0 : index
      %c0_37 = arith.constant 0 : index
      %40 = vector.load %arg13[%c0_36, %c0_37] : memref<8x128xf32, #tpu.memory_space<vmem>>, vector<8x128xf32>
      tpu.vector_store %arg13[%c0_36, %c0_37], %39 {strides = array<i32>} : memref<8x128xf32, #tpu.memory_space<vmem>>, vector<8x128xf32>,
    } else {
    }
    return
  }
  func.func @transform_0(%arg0: i32, %arg1: i32) -> (i32, i32) {
    %c0_i32 = arith.constant 0 : i32
    return %arg0, %arg1 : i32, i32
  }
  func.func @transform_1(%arg0: i32, %arg1: i32) -> (i32, i32) {
    %c0_i32 = arith.constant 0 : i32
    %c0_i32_0 = arith.constant 0 : i32
    return %arg1, %c0_i32 : i32, i32
  }
  func.func @transform_2(%arg0: i32, %arg1: i32) -> (i32, i32) {
    %c0_i32 = arith.constant 0 : i32
    %c0_i32_0 = arith.constant 0 : i32
    return %arg0, %c0_i32 : i32, i32
  }
  func.func @transform_3(%arg0: i32, %arg1: i32) -> (i32, i32) {
    %c0_i32 = arith.constant 0 : i32
    %c0_i32_0 = arith.constant 0 : i32
    %c0_i32_1 = arith.constant 0 : i32
    return %c0_i32, %c0_i32_0 : i32, i32
  }
  func.func @transform_4(%arg0: i32, %arg1: i32) -> (i32, i32) {
    %c0_i32 = arith.constant 0 : i32
    %c0_i32_0 = arith.constant 0 : i32
    %c0_i32_1 = arith.constant 0 : i32
    return %c0_i32, %c0_i32_0 : i32, i32
  }
  func.func @transform_5(%arg0: i32, %arg1: i32) -> (i32, i32) {
    %c0_i32 = arith.constant 0 : i32
    %c0_i32_0 = arith.constant 0 : i32
    %c0_i32_1 = arith.constant 0 : i32
    return %c0_i32, %c0_i32_0 : i32, i32
  }
  func.func @transform_6(%arg0: i32, %arg1: i32) -> (i32, i32) {
    %c0_i32 = arith.constant 0 : i32
    %c0_i32_0 = arith.constant 0 : i32
    %c0_i32_1 = arith.constant 0 : i32
    return %c0_i32, %c0_i32_0 : i32, i32
  }
  func.func @transform_7(%arg0: i32, %arg1: i32) -> (i32, i32) {
    %c0_i32 = arith.constant 0 : i32
    %c0_i32_0 = arith.constant 0 : i32
    %c0_i32_1 = arith.constant 0 : i32
    return %c0_i32, %c0_i32_0 : i32, i32
  }
  func.func @transform_8(%arg0: i32, %arg1: i32) -> (i32, i32) {
    %c0_i32 = arith.constant 0 : i32
    %c0_i32_0 = arith.constant 0 : i32
    %c0_i32_1 = arith.constant 0 : i32
    return %c0_i32, %c0_i32_0 : i32, i32
  }
  func.func @transform_9(%arg0: i32, %arg1: i32) -> (i32, i32) {
    %c0_i32 = arith.constant 0 : i32
    %c0_i32_0 = arith.constant 0 : i32
    %c0_i32_1 = arith.constant 0 : i32
    return %c0_i32, %c0_i32_0 : i32, i32
  }
  func.func @transform_10(%arg0: i32, %arg1: i32) -> (i32, i32) {
    %c0_i32 = arith.constant 0 : i32
    %c0_i32_0 = arith.constant 0 : i32
    %c0_i32_1 = arith.constant 0 : i32
    return %c0_i32, %c0_i32_0 : i32, i32
  }
  func.func @transform_11(%arg0: i32, %arg1: i32) -> (i32, i32) {
    %c0_i32 = arith.constant 0 : i32
    %c0_i32_0 = arith.constant 0 : i32
    return %arg0, %c0_i32 : i32, i32
  }
}

module attributes {stable_mosaic.version = 11 : i64} {
  func.func @gcn_v_kernel(%arg0: i32, %arg1: i32, %arg2: memref<8x16xf32, #tpu.memory_space<vmem>>, %arg3: memref<16x32xf32, #tpu.memory_space<vmem>>, %arg4: memref<8x32xf32, #tpu.memory_space<vmem>>, %arg5: memref<32x128xf32, #tpu.memory_space<vmem>>, %arg6: memref<32x128xf32, #tpu.memory_space<vmem>>, %arg7: memref<1x128xf32, #tpu.memory_space<vmem>>, %arg8: memref<128x128xf32, #tpu.memory_space<vmem>>, %arg9: memref<1x128xf32, #tpu.memory_space<vmem>>, %arg10: memref<1x128xf32, #tpu.memory_space<vmem>>, %arg11: memref<128x128xf32, #tpu.memory_space<vmem>>, %arg12: memref<1x128xf32, #tpu.memory_space<vmem>>, %arg13: memref<8x128xf32, #tpu.memory_space<vmem>>, %arg14: memref<8x32xf32, #tpu.memory_space<vmem>>) attributes {dimension_semantics = [#tpu.dimension_semantics<parallel>, #tpu.dimension_semantics<arbitrary>], iteration_bounds = array<i64: 1, 1>, scalar_prefetch = 0 : i64, scratch_operands = 1 : i64, tpu.core_type = #tpu.core_type<tc>, window_params = [{transform_indices = @transform_0, window_bounds = array<i64: 8, 16>}, {transform_indices = @transform_1, window_bounds = array<i64: 16, 32>}, {transform_indices = @transform_2, window_bounds = array<i64: 8, 32>}, {pipeline_mode = #tpu.pipeline_mode<synchronous>, transform_indices = @transform_3, window_bounds = array<i64: 32, 128>}, {pipeline_mode = #tpu.pipeline_mode<synchronous>, transform_indices = @transform_4, window_bounds = array<i64: 32, 128>}, {pipeline_mode = #tpu.pipeline_mode<synchronous>, transform_indices = @transform_5, window_bounds = array<i64: 1, 128>}, {pipeline_mode = #tpu.pipeline_mode<synchronous>, transform_indices = @transform_6, window_bounds = array<i64: 128, 128>}, {pipeline_mode = #tpu.pipeline_mode<synchronous>, transform_indices = @transform_7, window_bounds = array<i64: 1, 128>}, {pipeline_mode = #tpu.pipeline_mode<synchronous>, transform_indices = @transform_8, window_bounds = array<i64: 1, 128>}, {pipeline_mode = #tpu.pipeline_mode<synchronous>, transform_indices = @transform_9, window_bounds = array<i64: 128, 128>}, {pipeline_mode = #tpu.pipeline_mode<synchronous>, transform_indices = @transform_10, window_bounds = array<i64: 1, 128>}, {transform_indices = @transform_11, window_bounds = array<i64: 8, 128>}]} {
    %c0_i32 = arith.constant 0 : i32
    %0 = arith.cmpi eq, %arg1, %c0_i32 : i32
    %1 = arith.extui %0 : i1 to i32
    %c0_i32_0 = arith.constant 0 : i32
    %2 = arith.cmpi ne, %1, %c0_i32_0 : i32
    scf.if %2 {
      %cst_10 = arith.constant 0.000000e+00 : f32
      %12 = vector.broadcast %cst_10 : f32 to vector<8x32xf32>
      %c0_11 = arith.constant 0 : index
      %c0_12 = arith.constant 0 : index
      %13 = vector.load %arg14[%c0_11, %c0_12] : memref<8x32xf32, #tpu.memory_space<vmem>>, vector<8x32xf32>
      tpu.vector_store %arg14[%c0_11, %c0_12], %12 {strides = array<i32>} : memref<8x32xf32, #tpu.memory_space<vmem>>, vector<8x32xf32>,
    } else {
    }
    %c0 = arith.constant 0 : index
    %c0_1 = arith.constant 0 : index
    %3 = vector.load %arg2[%c0, %c0_1] : memref<8x16xf32, #tpu.memory_space<vmem>>, vector<8x16xf32>
    %c0_2 = arith.constant 0 : index
    %c0_3 = arith.constant 0 : index
    %4 = vector.load %arg3[%c0_2, %c0_3] : memref<16x32xf32, #tpu.memory_space<vmem>>, vector<16x32xf32>
    %c0_4 = arith.constant 0 : index
    %c0_5 = arith.constant 0 : index
    %5 = vector.load %arg14[%c0_4, %c0_5] : memref<8x32xf32, #tpu.memory_space<vmem>>, vector<8x32xf32>
    %cst = arith.constant dense<0.000000e+00> : vector<8x32xf32>
    %6 = tpu.matmul %3, %4, %cst {dimension_numbers = #tpu.dot_dimension_numbers<[1], [0], [0], [1], [0, 0, 1, 1], [], []>} : vector<8x16xf32>, vector<16x32xf32>, vector<8x32xf32> -> vector<8x32xf32>
    %7 = arith.addf %5, %6 : vector<8x32xf32>
    %c0_6 = arith.constant 0 : index
    %c0_7 = arith.constant 0 : index
    %8 = vector.load %arg14[%c0_6, %c0_7] : memref<8x32xf32, #tpu.memory_space<vmem>>, vector<8x32xf32>
    tpu.vector_store %arg14[%c0_6, %c0_7], %7 {strides = array<i32>} : memref<8x32xf32, #tpu.memory_space<vmem>>, vector<8x32xf32>,
    %c0_i32_8 = arith.constant 0 : i32
    %9 = arith.cmpi eq, %arg1, %c0_i32_8 : i32
    %10 = arith.extui %9 : i1 to i32
    %c0_i32_9 = arith.constant 0 : i32
    %11 = arith.cmpi ne, %10, %c0_i32_9 : i32
    scf.if %11 {
      %c0_10 = arith.constant 0 : index
      %c0_11 = arith.constant 0 : index
      %12 = vector.load %arg4[%c0_10, %c0_11] : memref<8x32xf32, #tpu.memory_space<vmem>>, vector<8x32xf32>
      %c0_12 = arith.constant 0 : index
      %c0_13 = arith.constant 0 : index
      %13 = vector.load %arg5[%c0_12, %c0_13] : memref<32x128xf32, #tpu.memory_space<vmem>>, vector<32x128xf32>
      %cst_14 = arith.constant dense<0.000000e+00> : vector<8x128xf32>
      %14 = tpu.matmul %12, %13, %cst_14 {dimension_numbers = #tpu.dot_dimension_numbers<[1], [0], [0], [1], [0, 0, 1, 1], [], []>} : vector<8x32xf32>, vector<32x128xf32>, vector<8x128xf32> -> vector<8x128xf32>
      %c0_15 = arith.constant 0 : index
      %c0_16 = arith.constant 0 : index
      %15 = vector.load %arg14[%c0_15, %c0_16] : memref<8x32xf32, #tpu.memory_space<vmem>>, vector<8x32xf32>
      %c0_17 = arith.constant 0 : index
      %c0_18 = arith.constant 0 : index
      %16 = vector.load %arg6[%c0_17, %c0_18] : memref<32x128xf32, #tpu.memory_space<vmem>>, vector<32x128xf32>
      %cst_19 = arith.constant dense<0.000000e+00> : vector<8x128xf32>
      %17 = tpu.matmul %15, %16, %cst_19 {dimension_numbers = #tpu.dot_dimension_numbers<[1], [0], [0], [1], [0, 0, 1, 1], [], []>} : vector<8x32xf32>, vector<32x128xf32>, vector<8x128xf32> -> vector<8x128xf32>
      %18 = arith.addf %14, %17 : vector<8x128xf32>
      %c0_20 = arith.constant 0 : index
      %c0_21 = arith.constant 0 : index
      %19 = vector.load %arg7[%c0_20, %c0_21] : memref<1x128xf32, #tpu.memory_space<vmem>>, vector<1x128xf32>
      %20 = vector.broadcast %19 : vector<1x128xf32> to vector<8x128xf32>
      %21 = arith.addf %18, %20 : vector<8x128xf32>
      %cst_22 = arith.constant 0.000000e+00 : f32
      %22 = vector.broadcast %cst_22 : f32 to vector<8x128xf32>
      %23 = arith.maximumf %21, %22 : vector<8x128xf32>
      %c0_23 = arith.constant 0 : index
      %c0_24 = arith.constant 0 : index
      %24 = vector.load %arg8[%c0_23, %c0_24] : memref<128x128xf32, #tpu.memory_space<vmem>>, vector<128x128xf32>
      %cst_25 = arith.constant dense<0.000000e+00> : vector<8x128xf32>
      %25 = tpu.matmul %23, %24, %cst_25 {dimension_numbers = #tpu.dot_dimension_numbers<[1], [0], [0], [1], [0, 0, 1, 1], [], []>} : vector<8x128xf32>, vector<128x128xf32>, vector<8x128xf32> -> vector<8x128xf32>
      %c0_26 = arith.constant 0 : index
      %c0_27 = arith.constant 0 : index
      %26 = vector.load %arg9[%c0_26, %c0_27] : memref<1x128xf32, #tpu.memory_space<vmem>>, vector<1x128xf32>
      %27 = vector.broadcast %26 : vector<1x128xf32> to vector<8x128xf32>
      %28 = arith.addf %25, %27 : vector<8x128xf32>
      %c0_28 = arith.constant 0 : index
      %c0_29 = arith.constant 0 : index
      %29 = vector.load %arg10[%c0_28, %c0_29] : memref<1x128xf32, #tpu.memory_space<vmem>>, vector<1x128xf32>
      %cst_30 = arith.constant 0.000000e+00 : f32
      %30 = vector.broadcast %cst_30 : f32 to vector<8x128xf32>
      %31 = arith.cmpf ogt, %28, %30 : vector<8x128xf32>
      %32 = vector.broadcast %29 : vector<1x128xf32> to vector<8x128xf32>
      %33 = arith.mulf %32, %28 : vector<8x128xf32>
      %34 = arith.select %31, %28, %33 : vector<8x128xi1>, vector<8x128xf32>
      %c0_31 = arith.constant 0 : index
      %c0_32 = arith.constant 0 : index
      %35 = vector.load %arg11[%c0_31, %c0_32] : memref<128x128xf32, #tpu.memory_space<vmem>>, vector<128x128xf32>
      %cst_33 = arith.constant dense<0.000000e+00> : vector<8x128xf32>
      %36 = tpu.matmul %34, %35, %cst_33 {dimension_numbers = #tpu.dot_dimension_numbers<[1], [0], [0], [1], [0, 0, 1, 1], [], []>} : vector<8x128xf32>, vector<128x128xf32>, vector<8x128xf32> -> vector<8x128xf32>
      %c0_34 = arith.constant 0 : index
      %c0_35 = arith.constant 0 : index
      %37 = vector.load %arg12[%c0_34, %c0_35] : memref<1x128xf32, #tpu.memory_space<vmem>>, vector<1x128xf32>
      %38 = vector.broadcast %37 : vector<1x128xf32> to vector<8x128xf32>
      %39 = arith.addf %36, %38 : vector<8x128xf32>
      %c0_36 = arith.constant 0 : index
      %c0_37 = arith.constant 0 : index
      %40 = vector.load %arg13[%c0_36, %c0_37] : memref<8x128xf32, #tpu.memory_space<vmem>>, vector<8x128xf32>
      tpu.vector_store %arg13[%c0_36, %c0_37], %39 {strides = array<i32>} : memref<8x128xf32, #tpu.memory_space<vmem>>, vector<8x128xf32>,
    } else {
    }
    return
  }
  func.func @transform_0(%arg0: i32, %arg1: i32) -> (i32, i32) {
    %c0_i32 = arith.constant 0 : i32
    return %arg0, %arg1 : i32, i32
  }
  func.func @transform_1(%arg0: i32, %arg1: i32) -> (i32, i32) {
    %c0_i32 = arith.constant 0 : i32
    %c0_i32_0 = arith.constant 0 : i32
    return %arg1, %c0_i32 : i32, i32
  }
  func.func @transform_2(%arg0: i32, %arg1: i32) -> (i32, i32) {
    %c0_i32 = arith.constant 0 : i32
    %c0_i32_0 = arith.constant 0 : i32
    return %arg0, %c0_i32 : i32, i32
  }
  func.func @transform_3(%arg0: i32, %arg1: i32) -> (i32, i32) {
    %c0_i32 = arith.constant 0 : i32
    %c0_i32_0 = arith.constant 0 : i32
    %c0_i32_1 = arith.constant 0 : i32
    return %c0_i32, %c0_i32_0 : i32, i32
  }
  func.func @transform_4(%arg0: i32, %arg1: i32) -> (i32, i32) {
    %c0_i32 = arith.constant 0 : i32
    %c0_i32_0 = arith.constant 0 : i32
    %c0_i32_1 = arith.constant 0 : i32
    return %c0_i32, %c0_i32_0 : i32, i32
  }
  func.func @transform_5(%arg0: i32, %arg1: i32) -> (i32, i32) {
    %c0_i32 = arith.constant 0 : i32
    %c0_i32_0 = arith.constant 0 : i32
    %c0_i32_1 = arith.constant 0 : i32
    return %c0_i32, %c0_i32_0 : i32, i32
  }
  func.func @transform_6(%arg0: i32, %arg1: i32) -> (i32, i32) {
    %c0_i32 = arith.constant 0 : i32
    %c0_i32_0 = arith.constant 0 : i32
    %c0_i32_1 = arith.constant 0 : i32
    return %c0_i32, %c0_i32_0 : i32, i32
  }
  func.func @transform_7(%arg0: i32, %arg1: i32) -> (i32, i32) {
    %c0_i32 = arith.constant 0 : i32
    %c0_i32_0 = arith.constant 0 : i32
    %c0_i32_1 = arith.constant 0 : i32
    return %c0_i32, %c0_i32_0 : i32, i32
  }
  func.func @transform_8(%arg0: i32, %arg1: i32) -> (i32, i32) {
    %c0_i32 = arith.constant 0 : i32
    %c0_i32_0 = arith.constant 0 : i32
    %c0_i32_1 = arith.constant 0 : i32
    return %c0_i32, %c0_i32_0 : i32, i32
  }
  func.func @transform_9(%arg0: i32, %arg1: i32) -> (i32, i32) {
    %c0_i32 = arith.constant 0 : i32
    %c0_i32_0 = arith.constant 0 : i32
    %c0_i32_1 = arith.constant 0 : i32
    return %c0_i32, %c0_i32_0 : i32, i32
  }
  func.func @transform_10(%arg0: i32, %arg1: i32) -> (i32, i32) {
    %c0_i32 = arith.constant 0 : i32
    %c0_i32_0 = arith.constant 0 : i32
    %c0_i32_1 = arith.constant 0 : i32
    return %c0_i32, %c0_i32_0 : i32, i32
  }
  func.func @transform_11(%arg0: i32, %arg1: i32) -> (i32, i32) {
    %c0_i32 = arith.constant 0 : i32
    %c0_i32_0 = arith.constant 0 : i32
    return %arg0, %c0_i32 : i32, i32
  }
}

</mosaic_0001>

<llo_original>
// kernel: tpu_custom_call.1
$region0: #{tpu_custom_call.1}
  #allocation0 [shape = 'u32[]', space=smem, size = 0x4, offset = 0x4, fixed_abs, tag = 'smem constant byte address 0x4 - core index']
  #allocation1 [shape = 'u32[144,128]{1,0:T(1,128)}', space=vmem, size = 0x12000, scoped, tag = 'internal scratch']
  #allocation2 [shape = 'f32[8,32]{1,0:T(8,128)}', space=vmem, size = 0x1000, scoped, tag = 'scratch operand']
  %s0 = inlined_call_operand.hbm [shape: f32[16,16], index: 0, kind: input, shape index: {}]
  %s1 = inlined_call_operand.hbm [shape: f32[16,32], index: 1, kind: input, shape index: {}]
  %s2 = inlined_call_operand.hbm [shape: f32[16,32], index: 2, kind: input, shape index: {}]
  %s3 = inlined_call_operand.hbm [shape: f32[32,128], index: 3, kind: input, shape index: {}]
  %s4 = inlined_call_operand.hbm [shape: f32[32,128], index: 4, kind: input, shape index: {}]
  %s5 = inlined_call_operand.vmem [shape: f32[1,128], index: 5, kind: input, shape index: {}]
  %s6 = inlined_call_operand.hbm [shape: f32[128,128], index: 6, kind: input, shape index: {}]
  %s7 = inlined_call_operand.vmem [shape: f32[1,128], index: 7, kind: input, shape index: {}]
  %s8 = inlined_call_operand.vmem [shape: f32[1,128], index: 8, kind: input, shape index: {}]
  %s9 = inlined_call_operand.hbm [shape: f32[128,128], index: 9, kind: input, shape index: {}]
  %s10 = inlined_call_operand.vmem [shape: f32[1,128], index: 10, kind: input, shape index: {}]
  %s11 = inlined_call_operand.hbm [shape: f32[8,128], index: 11, kind: output, shape index: {}]
  %s12 = sld [smem:[#allocation0]]
  $region90: #{tpu_custom_call.1} parent=0
    _
  %s14 = ssub.s32 1, %s12
  %s15 = scalar_select 0, %s14, %s12
  $region1: #{tpu_custom_call.1} parent=0
    #allocation3 [shape = 'u8[4096]{0}', space=vmem, size = 0x1000, scoped, tag = 'input window, operand 0, single buffered']
    #allocation4 [shape = 's32[1]{0}', space=sflag, size = 0x4, scoped, tag = 'scoped memory for tpu_custom_call.1']
    #allocation5 [shape = 's32[1]{0}', space=sflag, size = 0x4, scoped, tag = 'scoped memory for tpu_custom_call.1']
    #allocation6 [shape = 'u8[8192]{0}', space=vmem, size = 0x2000, scoped, tag = 'input window, operand 1, single buffered']
    #allocation7 [shape = 's32[1]{0}', space=sflag, size = 0x4, scoped, tag = 'scoped memory for tpu_custom_call.1']
    #allocation8 [shape = 'u8[4096]{0}', space=vmem, size = 0x1000, scoped, tag = 'input window, operand 2, single buffered']
    #allocation9 [shape = 'u8[16384]{0}', space=vmem, size = 0x4000, scoped, tag = 'input window, operand 3, single buffered']
    #allocation10 [shape = 's32[1]{0}', space=sflag, size = 0x4, scoped, tag = 'scoped memory for tpu_custom_call.1']
    #allocation11 [shape = 'u8[16384]{0}', space=vmem, size = 0x4000, scoped, tag = 'input window, operand 4, single buffered']
    #allocation12 [shape = 'u8[65536]{0}', space=vmem, size = 0x10000, scoped, tag = 'input window, operand 6, single buffered']
    #allocation13 [shape = 's32[1]{0}', space=sflag, size = 0x4, scoped, tag = 'scoped memory for tpu_custom_call.1']
    #allocation14 [shape = 'u8[65536]{0}', space=vmem, size = 0x10000, scoped, tag = 'input window, operand 9, single buffered']
    #allocation15 [shape = 'u8[4096]{0}', space=vmem, size = 0x1000, scoped, tag = 'output window, operand 0, single buffered']
    %16 = vsyncpa [#allocation4], 0
    %17 = vsyncpa [#allocation7], 0
    %18 = vsyncpa [#allocation10], 0
    %19 = vsyncpa [#allocation13], 0
    %20 = vsyncpa [#allocation5], 0
    // Predicated region
    $region2: #{tpu_custom_call.1} parent=1 // pred_check
      _
    $region3: #{tpu_custom_call.1} parent=1 // pred_check_branch
      %22 = sbr.rel (0) target = $region5
    $region4: #{tpu_custom_call.1} parent=1 // pred_region
      %s24 = ssub.s32 128, 128
      %25 = vsyncadd [#allocation4], %s24
      %s27 = sshll.u32 [#allocation3], 4
      %s28 = int_to_ptr.vmem [resolvable:$true] %s27
      %30 = dma.hbm_to_vmem [thread:$0]  %s0, 128, %s28, [#allocation4]
    $region5: #{tpu_custom_call.1} parent=1 // pred_fallthru
      _
    // Predicated region
    $region6: #{tpu_custom_call.1} parent=1 // pred_check
      _
    $region7: #{tpu_custom_call.1} parent=1 // pred_check_branch
      %32 = sbr.rel (0) target = $region9
    $region8: #{tpu_custom_call.1} parent=1 // pred_region
      %s34 = ssub.s32 256, 256
      %35 = vsyncadd [#allocation7], %s34
      %s36 = sshll.u32 [#allocation6], 4
      %s37 = int_to_ptr.vmem [resolvable:$true] %s36
      %42 = dma.hbm_to_vmem [thread:$0]  %s1, 256, %s37, [#allocation7], 128, 128, 8
    $region9: #{tpu_custom_call.1} parent=1 // pred_fallthru
      _
    // Predicated region
    $region10: #{tpu_custom_call.1} parent=1 // pred_check
      _
    $region11: #{tpu_custom_call.1} parent=1 // pred_check_branch
      %44 = sbr.rel (0) target = $region13
    $region12: #{tpu_custom_call.1} parent=1 // pred_region
      %s46 = ssub.s32 128, 128
      %47 = vsyncadd [#allocation7], %s46
      %s49 = sshll.u32 [#allocation8], 4
      %s50 = int_to_ptr.vmem [resolvable:$true] %s49
      %52 = dma.hbm_to_vmem [thread:$0]  %s2, 128, %s50, [#allocation7]
    $region13: #{tpu_custom_call.1} parent=1 // pred_fallthru
      _
    // Predicated region
    $region14: #{tpu_custom_call.1} parent=1 // pred_check
      _
    $region15: #{tpu_custom_call.1} parent=1 // pred_check_branch
      %54 = sbr.rel (0) target = $region17
    $region16: #{tpu_custom_call.1} parent=1 // pred_region
      %s56 = ssub.s32 512, 512
      %57 = vsyncadd [#allocation10], %s56
      %s58 = sshll.u32 [#allocation9], 4
      %s59 = int_to_ptr.vmem [resolvable:$true] %s58
      %64 = dma.hbm_to_vmem [thread:$0]  %s3, 512, %s59, [#allocation10], 128, 128, 8
    $region17: #{tpu_custom_call.1} parent=1 // pred_fallthru
      _
    // Predicated region
    $region18: #{tpu_custom_call.1} parent=1 // pred_check
      _
    $region19: #{tpu_custom_call.1} parent=1 // pred_check_branch
      %66 = sbr.rel (0) target = $region21
    $region20: #{tpu_custom_call.1} parent=1 // pred_region
      %s68 = ssub.s32 512, 512
      %69 = vsyncadd [#allocation10], %s68
      %s70 = sshll.u32 [#allocation11], 4
      %s71 = int_to_ptr.vmem [resolvable:$true] %s70
      %76 = dma.hbm_to_vmem [thread:$0]  %s4, 512, %s71, [#allocation10], 128, 128, 8
    $region21: #{tpu_custom_call.1} parent=1 // pred_fallthru
      _
    // Predicated region
    $region22: #{tpu_custom_call.1} parent=1 // pred_check
      _
    $region23: #{tpu_custom_call.1} parent=1 // pred_check_branch
      %78 = sbr.rel (0) target = $region25
    $region24: #{tpu_custom_call.1} parent=1 // pred_region
      _
    $region25: #{tpu_custom_call.1} parent=1 // pred_fallthru
      _
    // Predicated region
    $region26: #{tpu_custom_call.1} parent=1 // pred_check
      _
    $region27: #{tpu_custom_call.1} parent=1 // pred_check_branch
      %80 = sbr.rel (0) target = $region29
    $region28: #{tpu_custom_call.1} parent=1 // pred_region
      %s82 = ssub.s32 2048, 2048
      %83 = vsyncadd [#allocation13], %s82
      %s84 = sshll.u32 [#allocation12], 4
      %s85 = int_to_ptr.vmem [resolvable:$true] %s84
      %90 = dma.hbm_to_vmem [thread:$0]  %s6, 2048, %s85, [#allocation13], 128, 128, 8
    $region29: #{tpu_custom_call.1} parent=1 // pred_fallthru
      _
    // Predicated region
    $region30: #{tpu_custom_call.1} parent=1 // pred_check
      _
    $region31: #{tpu_custom_call.1} parent=1 // pred_check_branch
      %92 = sbr.rel (0) target = $region33
    $region32: #{tpu_custom_call.1} parent=1 // pred_region
      _
    $region33: #{tpu_custom_call.1} parent=1 // pred_fallthru
      _
    // Predicated region
    $region34: #{tpu_custom_call.1} parent=1 // pred_check
      _
    $region35: #{tpu_custom_call.1} parent=1 // pred_check_branch
      %94 = sbr.rel (0) target = $region37
    $region36: #{tpu_custom_call.1} parent=1 // pred_region
      _
    $region37: #{tpu_custom_call.1} parent=1 // pred_fallthru
      _
    // Predicated region
    $region38: #{tpu_custom_call.1} parent=1 // pred_check
      _
    $region39: #{tpu_custom_call.1} parent=1 // pred_check_branch
      %96 = sbr.rel (0) target = $region41
    $region40: #{tpu_custom_call.1} parent=1 // pred_region
      %s98 = ssub.s32 2048, 2048
      %99 = vsyncadd [#allocation13], %s98
      %s100 = sshll.u32 [#allocation14], 4
      %s101 = int_to_ptr.vmem [resolvable:$true] %s100
      %106 = dma.hbm_to_vmem [thread:$0]  %s9, 2048, %s101, [#allocation13], 128, 128, 8
    $region41: #{tpu_custom_call.1} parent=1 // pred_fallthru
      _
    // Predicated region
    $region42: #{tpu_custom_call.1} parent=1 // pred_check
      _
    $region43: #{tpu_custom_call.1} parent=1 // pred_check_branch
      %108 = sbr.rel (0) target = $region45
    $region44: #{tpu_custom_call.1} parent=1 // pred_region
      _
    $region45: #{tpu_custom_call.1} parent=1 // pred_fallthru
      _
    // Predicated region
    $region46: #{tpu_custom_call.1} parent=1 // pred_check
      _
    $region47: #{tpu_custom_call.1} parent=1 // pred_check_branch
      %110 = sbr.rel (0) target = $region49
    $region48: #{tpu_custom_call.1} parent=1 // pred_region
      %111 = dma.done [#allocation4], 128
    $region49: #{tpu_custom_call.1} parent=1 // pred_fallthru
      _
    // Predicated region
    $region50: #{tpu_custom_call.1} parent=1 // pred_check
      _
    $region51: #{tpu_custom_call.1} parent=1 // pred_check_branch
      %113 = sbr.rel (0) target = $region53
    $region52: #{tpu_custom_call.1} parent=1 // pred_region
      %114 = dma.done [#allocation7], 256
    $region53: #{tpu_custom_call.1} parent=1 // pred_fallthru
      _
    // Predicated region
    $region54: #{tpu_custom_call.1} parent=1 // pred_check
      _
    $region55: #{tpu_custom_call.1} parent=1 // pred_check_branch
      %116 = sbr.rel (0) target = $region57
    $region56: #{tpu_custom_call.1} parent=1 // pred_region
      %117 = dma.done [#allocation7], 128
    $region57: #{tpu_custom_call.1} parent=1 // pred_fallthru
      _
    // Predicated region
    $region58: #{tpu_custom_call.1} parent=1 // pred_check
      _
    $region59: #{tpu_custom_call.1} parent=1 // pred_check_branch
      %119 = sbr.rel (0) target = $region61
    $region60: #{tpu_custom_call.1} parent=1 // pred_region
      %120 = dma.done [#allocation10], 512
    $region61: #{tpu_custom_call.1} parent=1 // pred_fallthru
      _
    // Predicated region
    $region62: #{tpu_custom_call.1} parent=1 // pred_check
      _
    $region63: #{tpu_custom_call.1} parent=1 // pred_check_branch
      %122 = sbr.rel (0) target = $region65
    $region64: #{tpu_custom_call.1} parent=1 // pred_region
      %123 = dma.done [#allocation10], 512
    $region65: #{tpu_custom_call.1} parent=1 // pred_fallthru
      _
    // Predicated region
    $region66: #{tpu_custom_call.1} parent=1 // pred_check
      _
    $region67: #{tpu_custom_call.1} parent=1 // pred_check_branch
      %125 = sbr.rel (0) target = $region69
    $region68: #{tpu_custom_call.1} parent=1 // pred_region
      %126 = dma.done [#allocation13], 2048
    $region69: #{tpu_custom_call.1} parent=1 // pred_fallthru
      _
    // Predicated region
    $region70: #{tpu_custom_call.1} parent=1 // pred_check
      _
    $region71: #{tpu_custom_call.1} parent=1 // pred_check_branch
      %128 = sbr.rel (0) target = $region73
    $region72: #{tpu_custom_call.1} parent=1 // pred_region
      %129 = dma.done [#allocation13], 2048
    $region73: #{tpu_custom_call.1} parent=1 // pred_fallthru
      _
    %p130 = scmp.eq.s32.totalorder 0, 0
    // Predicated region
    $region74: #{tpu_custom_call.1} parent=1 // pred_check
      %p131 = pneg %p130
    $region75: #{tpu_custom_call.1} parent=1 // pred_check_branch
      %133 = sbr.rel (%p131) target = $region77
    $region76: #{tpu_custom_call.1} parent=1 // pred_region
      %vm134 = vcmask 261120
      %135 = vst.msk [vmem:[#allocation2] sm:$0xff] %vm134, 0.0
    $region77: #{tpu_custom_call.1} parent=1 // pred_fallthru
      _
    %v136 = vld [vmem:[#allocation3] sm:$0xff]
    %v137 = vld [vmem:[#allocation6] sm:$0xff]
    %v138 = vld [vmem:[#allocation6 + $0x8] sm:$0xff]
    %v139 = vld [vmem:[#allocation2] sm:$0xff]
    %vm140 = vcmask 130048
    %v142 = vsel %vm140, %v136, 0
    %144 = vmatprep.subr.mxu0 0.0
    %145 = vmatpush1.msra.mxu0 0.0
    %146 = vmatprep.subr.mxu0 0.0
    %147 = vmatpush1.msra.mxu0 0.0
    %148 = vmatprep.subr.mxu0 0.0
    %149 = vmatpush1.msra.mxu0 0.0
    %150 = vmatprep.subr.mxu0 0.0
    %151 = vmatpush1.msra.mxu0 0.0
    %152 = vmatprep.subr.mxu0 0.0
    %153 = vmatpush1.msra.mxu0 0.0
    %154 = vmatprep.subr.mxu0 0.0
    %155 = vmatpush1.msra.mxu0 0.0
    %156 = vmatprep.subr.mxu0 0.0
    %157 = vmatpush1.msra.mxu0 0.0
    %158 = vmatprep.subr.mxu0 0.0
    %159 = vmatpush1.msra.mxu0 0.0
    %160 = vmatprep.subr.mxu0 0.0
    %161 = vmatpush1.msra.mxu0 0.0
    %162 = vmatprep.subr.mxu0 0.0
    %163 = vmatpush1.msra.mxu0 0.0
    %164 = vmatprep.subr.mxu0 0.0
    %165 = vmatpush1.msra.mxu0 0.0
    %166 = vmatprep.subr.mxu0 0.0
    %167 = vmatpush1.msra.mxu0 0.0
    %168 = vmatprep.subr.mxu0 0.0
    %169 = vmatpush1.msra.mxu0 0.0
    %170 = vmatprep.subr.mxu0 0.0
    %171 = vmatpush1.msra.mxu0 0.0
    %172 = vmatprep.subr.mxu0 0.0
    %173 = vmatpush1.msra.mxu0 %v138
    %174 = vmatprep.subr.mxu0 0.0
    %175 = vmatpush1.msra.mxu0 %v137
    %176 = vmatprep.subr.mxu0 0.0
    %177 = vmatpush2.msra.mxu0 0.0
    %178 = vmatprep.subr.mxu0 0.0
    %179 = vmatpush2.msra.mxu0 0.0
    %180 = vmatprep.subr.mxu0 0.0
    %181 = vmatpush2.msra.mxu0 0.0
    %182 = vmatprep.subr.mxu0 0.0
    %183 = vmatpush2.msra.mxu0 0.0
    %184 = vmatprep.subr.mxu0 0.0
    %185 = vmatpush2.msra.mxu0 0.0
    %186 = vmatprep.subr.mxu0 0.0
    %187 = vmatpush2.msra.mxu0 0.0
    %188 = vmatprep.subr.mxu0 0.0
    %189 = vmatpush2.msra.mxu0 0.0
    %190 = vmatprep.subr.mxu0 0.0
    %191 = vmatpush2.msra.mxu0 0.0
    %192 = vmatprep.subr.mxu0 0.0
    %193 = vmatpush2.msra.mxu0 0.0
    %194 = vmatprep.subr.mxu0 0.0
    %195 = vmatpush2.msra.mxu0 0.0
    %196 = vmatprep.subr.mxu0 0.0
    %197 = vmatpush2.msra.mxu0 0.0
    %198 = vmatprep.subr.mxu0 0.0
    %199 = vmatpush2.msra.mxu0 0.0
    %200 = vmatprep.subr.mxu0 0.0
    %201 = vmatpush2.msra.mxu0 0.0
    %202 = vmatprep.subr.mxu0 0.0
    %203 = vmatpush2.msra.mxu0 0.0
    %204 = vmatprep.subr.mxu0 0.0
    %205 = vmatpush2.msra.mxu0 0.0
    %206 = vmatprep.subr.mxu0 0.0
    %207 = vmatpush2.msra.mxu0 0.0
    %208 = vmatprep.mubr.f32.mxu0 0.0
    %209 = vmatmul.mubr.f32.gmra.mxu0 %v142
    %v210 = vpop.f32.mrf.mxu0
    %v211 = vadd.f32 0.0, %v210
    %v212 = vpop.f32.mrf.mxu0
    %213 = vdwg.mxu0
    %v214 = vadd.f32 %v139, %v211
    %vm215 = vcmask 261120
    %216 = vst.msk [vmem:[#allocation2] sm:$0xff] %vm215, %v214
    // Predicated region
    $region78: #{tpu_custom_call.1} parent=1 // pred_check
      %p217 = pneg %p130
    $region79: #{tpu_custom_call.1} parent=1 // pred_check_branch
      %219 = sbr.rel (%p217) target = $region81
    $region80: #{tpu_custom_call.1} parent=1 // pred_region
      %v220 = vld [vmem:[#allocation8] sm:$0xff]
      %v221 = vld [vmem:[#allocation9] sm:$0xff]
      %v222 = vld [vmem:[#allocation9 + $0x8] sm:$0xff]
      %v223 = vld [vmem:[#allocation9 + $0x10] sm:$0xff]
      %v224 = vld [vmem:[#allocation9 + $0x18] sm:$0xff]
      %v225 = vld [vmem:[#allocation2] sm:$0xff]
      %v226 = vld [vmem:[#allocation11] sm:$0xff]
      %v227 = vld [vmem:[#allocation11 + $0x8] sm:$0xff]
      %v228 = vld [vmem:[#allocation11 + $0x10] sm:$0xff]
      %v229 = vld [vmem:[#allocation11 + $0x18] sm:$0xff]
      %v231 = vsel %vm215, %v225, 0
      %233 = vmatprep.subr.mxu0 0.0
      %234 = vmatpush1.msra.mxu0 0.0
      %235 = vmatprep.subr.mxu0 0.0
      %236 = vmatpush1.msra.mxu0 0.0
      %237 = vmatprep.subr.mxu0 0.0
      %238 = vmatpush1.msra.mxu0 0.0
      %239 = vmatprep.subr.mxu0 0.0
      %240 = vmatpush1.msra.mxu0 0.0
      %241 = vmatprep.subr.mxu0 0.0
      %242 = vmatpush1.msra.mxu0 0.0
      %243 = vmatprep.subr.mxu0 0.0
      %244 = vmatpush1.msra.mxu0 0.0
      %245 = vmatprep.subr.mxu0 0.0
      %246 = vmatpush1.msra.mxu0 0.0
      %247 = vmatprep.subr.mxu0 0.0
      %248 = vmatpush1.msra.mxu0 0.0
      %249 = vmatprep.subr.mxu0 0.0
      %250 = vmatpush1.msra.mxu0 0.0
      %251 = vmatprep.subr.mxu0 0.0
      %252 = vmatpush1.msra.mxu0 0.0
      %253 = vmatprep.subr.mxu0 0.0
      %254 = vmatpush1.msra.mxu0 0.0
      %255 = vmatprep.subr.mxu0 0.0
      %256 = vmatpush1.msra.mxu0 0.0
      %257 = vmatprep.subr.mxu0 0.0
      %258 = vmatpush1.msra.mxu0 %v229
      %259 = vmatprep.subr.mxu0 0.0
      %260 = vmatpush1.msra.mxu0 %v228
      %261 = vmatprep.subr.mxu0 0.0
      %262 = vmatpush1.msra.mxu0 %v227
      %263 = vmatprep.subr.mxu0 0.0
      %264 = vmatpush1.msra.mxu0 %v226
      %265 = vmatprep.subr.mxu0 0.0
      %266 = vmatpush2.msra.mxu0 0.0
      %267 = vmatprep.subr.mxu0 0.0
      %268 = vmatpush2.msra.mxu0 0.0
      %269 = vmatprep.subr.mxu0 0.0
      %270 = vmatpush2.msra.mxu0 0.0
      %271 = vmatprep.subr.mxu0 0.0
      %272 = vmatpush2.msra.mxu0 0.0
      %273 = vmatprep.subr.mxu0 0.0
      %274 = vmatpush2.msra.mxu0 0.0
      %275 = vmatprep.subr.mxu0 0.0
      %276 = vmatpush2.msra.mxu0 0.0
      %277 = vmatprep.subr.mxu0 0.0
      %278 = vmatpush2.msra.mxu0 0.0
      %279 = vmatprep.subr.mxu0 0.0
      %280 = vmatpush2.msra.mxu0 0.0
      %281 = vmatprep.subr.mxu0 0.0
      %282 = vmatpush2.msra.mxu0 0.0
      %283 = vmatprep.subr.mxu0 0.0
      %284 = vmatpush2.msra.mxu0 0.0
      %285 = vmatprep.subr.mxu0 0.0
      %286 = vmatpush2.msra.mxu0 0.0
      %287 = vmatprep.subr.mxu0 0.0
      %288 = vmatpush2.msra.mxu0 0.0
      %289 = vmatprep.subr.mxu0 0.0
      %290 = vmatpush2.msra.mxu0 0.0
      %291 = vmatprep.subr.mxu0 0.0
      %292 = vmatpush2.msra.mxu0 0.0
      %293 = vmatprep.subr.mxu0 0.0
      %294 = vmatpush2.msra.mxu0 0.0
      %295 = vmatprep.subr.mxu0 0.0
      %296 = vmatpush2.msra.mxu0 0.0
      %297 = vmatprep.mubr.f32.mxu0 0.0
      %298 = vmatmul.mubr.f32.gmra.mxu0 %v231
      %v299 = vpop.f32.mrf.mxu0
      %v300 = vadd.f32 0.0, %v299
      %v301 = vpop.f32.mrf.mxu0
      %302 = vdwg.mxu0
      %v304 = vsel %vm215, %v220, 0
      %306 = vmatprep.subr.mxu0 0.0
      %307 = vmatpush1.msra.mxu0 0.0
      %308 = vmatprep.subr.mxu0 0.0
      %309 = vmatpush1.msra.mxu0 0.0
      %310 = vmatprep.subr.mxu0 0.0
      %311 = vmatpush1.msra.mxu0 0.0
      %312 = vmatprep.subr.mxu0 0.0
      %313 = vmatpush1.msra.mxu0 0.0
      %314 = vmatprep.subr.mxu0 0.0
      %315 = vmatpush1.msra.mxu0 0.0
      %316 = vmatprep.subr.mxu0 0.0
      %317 = vmatpush1.msra.mxu0 0.0
      %318 = vmatprep.subr.mxu0 0.0
      %319 = vmatpush1.msra.mxu0 0.0
      %320 = vmatprep.subr.mxu0 0.0
      %321 = vmatpush1.msra.mxu0 0.0
      %322 = vmatprep.subr.mxu0 0.0
      %323 = vmatpush1.msra.mxu0 0.0
      %324 = vmatprep.subr.mxu0 0.0
      %325 = vmatpush1.msra.mxu0 0.0
      %326 = vmatprep.subr.mxu0 0.0
      %327 = vmatpush1.msra.mxu0 0.0
      %328 = vmatprep.subr.mxu0 0.0
      %329 = vmatpush1.msra.mxu0 0.0
      %330 = vmatprep.subr.mxu0 0.0
      %331 = vmatpush1.msra.mxu0 %v224
      %332 = vmatprep.subr.mxu0 0.0
      %333 = vmatpush1.msra.mxu0 %v223
      %334 = vmatprep.subr.mxu0 0.0
      %335 = vmatpush1.msra.mxu0 %v222
      %336 = vmatprep.subr.mxu0 0.0
      %337 = vmatpush1.msra.mxu0 %v221
      %338 = vmatprep.subr.mxu0 0.0
      %339 = vmatpush2.msra.mxu0 0.0
      %340 = vmatprep.subr.mxu0 0.0
      %341 = vmatpush2.msra.mxu0 0.0
      %342 = vmatprep.subr.mxu0 0.0
      %343 = vmatpush2.msra.mxu0 0.0
      %344 = vmatprep.subr.mxu0 0.0
      %345 = vmatpush2.msra.mxu0 0.0
      %346 = vmatprep.subr.mxu0 0.0
      %347 = vmatpush2.msra.mxu0 0.0
      %348 = vmatprep.subr.mxu0 0.0
      %349 = vmatpush2.msra.mxu0 0.0
      %350 = vmatprep.subr.mxu0 0.0
      %351 = vmatpush2.msra.mxu0 0.0
      %352 = vmatprep.subr.mxu0 0.0
      %353 = vmatpush2.msra.mxu0 0.0
      %354 = vmatprep.subr.mxu0 0.0
      %355 = vmatpush2.msra.mxu0 0.0
      %356 = vmatprep.subr.mxu0 0.0
      %357 = vmatpush2.msra.mxu0 0.0
      %358 = vmatprep.subr.mxu0 0.0
      %359 = vmatpush2.msra.mxu0 0.0
      %360 = vmatprep.subr.mxu0 0.0
      %361 = vmatpush2.msra.mxu0 0.0
      %362 = vmatprep.subr.mxu0 0.0
      %363 = vmatpush2.msra.mxu0 0.0
      %364 = vmatprep.subr.mxu0 0.0
      %365 = vmatpush2.msra.mxu0 0.0
      %366 = vmatprep.subr.mxu0 0.0
      %367 = vmatpush2.msra.mxu0 0.0
      %368 = vmatprep.subr.mxu0 0.0
      %369 = vmatpush2.msra.mxu0 0.0
      %370 = vmatprep.mubr.f32.mxu0 0.0
      %371 = vmatmul.mubr.f32.gmra.mxu0 %v304
      %v372 = vpop.f32.mrf.mxu0
      %v373 = vadd.f32 %v300, %v372
      %v374 = vpop.f32.mrf.mxu0
      %375 = vdwg.mxu0
      %v376 = vld [vmem:[%s5] sm:$0x1]
      %v378 = vlaneseq
      %v379 = vshrl.u32 %v378, 7
      %v380 = vsub.s32 0, %v379
      %v381 = vrot.slane %v376, %v380
      %v383 = vadd.f32 %v373, %v381
      %v384 = vmax.f32 %v383, 0.0
      %v385 = vld [vmem:[#allocation12] sm:$0xff]
      %v386 = vld [vmem:[#allocation12 + $0x8] sm:$0xff]
      %v387 = vld [vmem:[#allocation12 + $0x10] sm:$0xff]
      %v388 = vld [vmem:[#allocation12 + $0x18] sm:$0xff]
      %v389 = vld [vmem:[#allocation12 + $0x20] sm:$0xff]
      %v390 = vld [vmem:[#allocation12 + $0x28] sm:$0xff]
      %v391 = vld [vmem:[#allocation12 + $0x30] sm:$0xff]
      %v392 = vld [vmem:[#allocation12 + $0x38] sm:$0xff]
      %v393 = vld [vmem:[#allocation12 + $0x40] sm:$0xff]
      %v394 = vld [vmem:[#allocation12 + $0x48] sm:$0xff]
      %v395 = vld [vmem:[#allocation12 + $0x50] sm:$0xff]
      %v396 = vld [vmem:[#allocation12 + $0x58] sm:$0xff]
      %v397 = vld [vmem:[#allocation12 + $0x60] sm:$0xff]
      %v398 = vld [vmem:[#allocation12 + $0x68] sm:$0xff]
      %v399 = vld [vmem:[#allocation12 + $0x70] sm:$0xff]
      %v400 = vld [vmem:[#allocation12 + $0x78] sm:$0xff]
      %v401 = vld [vmem:[%s7] sm:$0x1]
      %v403 = vlaneseq
      %v404 = vshrl.u32 %v403, 7
      %v405 = vsub.s32 0, %v404
      %v406 = vrot.slane %v401, %v405
      %408 = vmatprep.subr.mxu0 0.0
      %409 = vmatpush1.msra.mxu0 %v400
      %410 = vmatprep.subr.mxu0 0.0
      %411 = vmatpush1.msra.mxu0 %v399
      %412 = vmatprep.subr.mxu0 0.0
      %413 = vmatpush1.msra.mxu0 %v398
      %414 = vmatprep.subr.mxu0 0.0
      %415 = vmatpush1.msra.mxu0 %v397
      %416 = vmatprep.subr.mxu0 0.0
      %417 = vmatpush1.msra.mxu0 %v396
      %418 = vmatprep.subr.mxu0 0.0
      %419 = vmatpush1.msra.mxu0 %v395
      %420 = vmatprep.subr.mxu0 0.0
      %421 = vmatpush1.msra.mxu0 %v394
      %422 = vmatprep.subr.mxu0 0.0
      %423 = vmatpush1.msra.mxu0 %v393
      %424 = vmatprep.subr.mxu0 0.0
      %425 = vmatpush1.msra.mxu0 %v392
      %426 = vmatprep.subr.mxu0 0.0
      %427 = vmatpush1.msra.mxu0 %v391
      %428 = vmatprep.subr.mxu0 0.0
      %429 = vmatpush1.msra.mxu0 %v390
      %430 = vmatprep.subr.mxu0 0.0
      %431 = vmatpush1.msra.mxu0 %v389
      %432 = vmatprep.subr.mxu0 0.0
      %433 = vmatpush1.msra.mxu0 %v388
      %434 = vmatprep.subr.mxu0 0.0
      %435 = vmatpush1.msra.mxu0 %v387
      %436 = vmatprep.subr.mxu0 0.0
      %437 = vmatpush1.msra.mxu0 %v386
      %438 = vmatprep.subr.mxu0 0.0
      %439 = vmatpush1.msra.mxu0 %v385
      %440 = vmatprep.subr.mxu0 0.0
      %441 = vmatpush2.msra.mxu0 0.0
      %442 = vmatprep.subr.mxu0 0.0
      %443 = vmatpush2.msra.mxu0 0.0
      %444 = vmatprep.subr.mxu0 0.0
      %445 = vmatpush2.msra.mxu0 0.0
      %446 = vmatprep.subr.mxu0 0.0
      %447 = vmatpush2.msra.mxu0 0.0
      %448 = vmatprep.subr.mxu0 0.0
      %449 = vmatpush2.msra.mxu0 0.0
      %450 = vmatprep.subr.mxu0 0.0
      %451 = vmatpush2.msra.mxu0 0.0
      %452 = vmatprep.subr.mxu0 0.0
      %453 = vmatpush2.msra.mxu0 0.0
      %454 = vmatprep.subr.mxu0 0.0
      %455 = vmatpush2.msra.mxu0 0.0
      %456 = vmatprep.subr.mxu0 0.0
      %457 = vmatpush2.msra.mxu0 0.0
      %458 = vmatprep.subr.mxu0 0.0
      %459 = vmatpush2.msra.mxu0 0.0
      %460 = vmatprep.subr.mxu0 0.0
      %461 = vmatpush2.msra.mxu0 0.0
      %462 = vmatprep.subr.mxu0 0.0
      %463 = vmatpush2.msra.mxu0 0.0
      %464 = vmatprep.subr.mxu0 0.0
      %465 = vmatpush2.msra.mxu0 0.0
      %466 = vmatprep.subr.mxu0 0.0
      %467 = vmatpush2.msra.mxu0 0.0
      %468 = vmatprep.subr.mxu0 0.0
      %469 = vmatpush2.msra.mxu0 0.0
      %470 = vmatprep.subr.mxu0 0.0
      %471 = vmatpush2.msra.mxu0 0.0
      %472 = vmatprep.mubr.f32.mxu0 0.0
      %473 = vmatmul.mubr.f32.gmra.mxu0 %v384
      %v474 = vpop.f32.mrf.mxu0
      %v475 = vadd.f32 %v406, %v474
      %v476 = vpop.f32.mrf.mxu0
      %477 = vdwg.mxu0
      %v478 = vld [vmem:[%s8] sm:$0x1]
      %vm479 = vcmp.gt.f32.partialorder %v475, 0.0
      %v481 = vlaneseq
      %v482 = vshrl.u32 %v481, 7
      %v483 = vsub.s32 0, %v482
      %v484 = vrot.slane %v478, %v483
      %v486 = vmul.f32 %v484, %v475
      %v487 = vsel %vm479, %v475, %v486
      %v488 = vld [vmem:[#allocation14] sm:$0xff]
      %v489 = vld [vmem:[#allocation14 + $0x8] sm:$0xff]
      %v490 = vld [vmem:[#allocation14 + $0x10] sm:$0xff]
      %v491 = vld [vmem:[#allocation14 + $0x18] sm:$0xff]
      %v492 = vld [vmem:[#allocation14 + $0x20] sm:$0xff]
      %v493 = vld [vmem:[#allocation14 + $0x28] sm:$0xff]
      %v494 = vld [vmem:[#allocation14 + $0x30] sm:$0xff]
      %v495 = vld [vmem:[#allocation14 + $0x38] sm:$0xff]
      %v496 = vld [vmem:[#allocation14 + $0x40] sm:$0xff]
      %v497 = vld [vmem:[#allocation14 + $0x48] sm:$0xff]
      %v498 = vld [vmem:[#allocation14 + $0x50] sm:$0xff]
      %v499 = vld [vmem:[#allocation14 + $0x58] sm:$0xff]
      %v500 = vld [vmem:[#allocation14 + $0x60] sm:$0xff]
      %v501 = vld [vmem:[#allocation14 + $0x68] sm:$0xff]
      %v502 = vld [vmem:[#allocation14 + $0x70] sm:$0xff]
      %v503 = vld [vmem:[#allocation14 + $0x78] sm:$0xff]
      %v504 = vld [vmem:[%s10] sm:$0x1]
      %v506 = vlaneseq
      %v507 = vshrl.u32 %v506, 7
      %v508 = vsub.s32 0, %v507
      %v509 = vrot.slane %v504, %v508
      %511 = vmatprep.subr.mxu0 0.0
      %512 = vmatpush1.msra.mxu0 %v503
      %513 = vmatprep.subr.mxu0 0.0
      %514 = vmatpush1.msra.mxu0 %v502
      %515 = vmatprep.subr.mxu0 0.0
      %516 = vmatpush1.msra.mxu0 %v501
      %517 = vmatprep.subr.mxu0 0.0
      %518 = vmatpush1.msra.mxu0 %v500
      %519 = vmatprep.subr.mxu0 0.0
      %520 = vmatpush1.msra.mxu0 %v499
      %521 = vmatprep.subr.mxu0 0.0
      %522 = vmatpush1.msra.mxu0 %v498
      %523 = vmatprep.subr.mxu0 0.0
      %524 = vmatpush1.msra.mxu0 %v497
      %525 = vmatprep.subr.mxu0 0.0
      %526 = vmatpush1.msra.mxu0 %v496
      %527 = vmatprep.subr.mxu0 0.0
      %528 = vmatpush1.msra.mxu0 %v495
      %529 = vmatprep.subr.mxu0 0.0
      %530 = vmatpush1.msra.mxu0 %v494
      %531 = vmatprep.subr.mxu0 0.0
      %532 = vmatpush1.msra.mxu0 %v493
      %533 = vmatprep.subr.mxu0 0.0
      %534 = vmatpush1.msra.mxu0 %v492
      %535 = vmatprep.subr.mxu0 0.0
      %536 = vmatpush1.msra.mxu0 %v491
      %537 = vmatprep.subr.mxu0 0.0
      %538 = vmatpush1.msra.mxu0 %v490
      %539 = vmatprep.subr.mxu0 0.0
      %540 = vmatpush1.msra.mxu0 %v489
      %541 = vmatprep.subr.mxu0 0.0
      %542 = vmatpush1.msra.mxu0 %v488
      %543 = vmatprep.subr.mxu0 0.0
      %544 = vmatpush2.msra.mxu0 0.0
      %545 = vmatprep.subr.mxu0 0.0
      %546 = vmatpush2.msra.mxu0 0.0
      %547 = vmatprep.subr.mxu0 0.0
      %548 = vmatpush2.msra.mxu0 0.0
      %549 = vmatprep.subr.mxu0 0.0
      %550 = vmatpush2.msra.mxu0 0.0
      %551 = vmatprep.subr.mxu0 0.0
      %552 = vmatpush2.msra.mxu0 0.0
      %553 = vmatprep.subr.mxu0 0.0
      %554 = vmatpush2.msra.mxu0 0.0
      %555 = vmatprep.subr.mxu0 0.0
      %556 = vmatpush2.msra.mxu0 0.0
      %557 = vmatprep.subr.mxu0 0.0
      %558 = vmatpush2.msra.mxu0 0.0
      %559 = vmatprep.subr.mxu0 0.0
      %560 = vmatpush2.msra.mxu0 0.0
      %561 = vmatprep.subr.mxu0 0.0
      %562 = vmatpush2.msra.mxu0 0.0
      %563 = vmatprep.subr.mxu0 0.0
      %564 = vmatpush2.msra.mxu0 0.0
      %565 = vmatprep.subr.mxu0 0.0
      %566 = vmatpush2.msra.mxu0 0.0
      %567 = vmatprep.subr.mxu0 0.0
      %568 = vmatpush2.msra.mxu0 0.0
      %569 = vmatprep.subr.mxu0 0.0
      %570 = vmatpush2.msra.mxu0 0.0
      %571 = vmatprep.subr.mxu0 0.0
      %572 = vmatpush2.msra.mxu0 0.0
      %573 = vmatprep.subr.mxu0 0.0
      %574 = vmatpush2.msra.mxu0 0.0
      %575 = vmatprep.mubr.f32.mxu0 0.0
      %576 = vmatmul.mubr.f32.gmra.mxu0 %v487
      %v577 = vpop.f32.mrf.mxu0
      %v578 = vadd.f32 %v509, %v577
      %v579 = vpop.f32.mrf.mxu0
      %580 = vdwg.mxu0
      %581 = vst [vmem:[#allocation15] sm:$0xff] %v578
    $region81: #{tpu_custom_call.1} parent=1 // pred_fallthru
      _
    // Predicated region
    $region82: #{tpu_custom_call.1} parent=1 // pred_check
      _
    $region83: #{tpu_custom_call.1} parent=1 // pred_check_branch
      %583 = sbr.rel (0) target = $region85
    $region84: #{tpu_custom_call.1} parent=1 // pred_region
      %s585 = ssub.s32 128, 128
      %586 = vsyncadd [#allocation5], %s585
      %s588 = sshll.u32 [#allocation15], 4
      %s589 = int_to_ptr.vmem [resolvable:$true] %s588
      %591 = dma.vmem_to_hbm [thread:$0]  %s589, 128, %s11, [#allocation5]
    $region85: #{tpu_custom_call.1} parent=1 // pred_fallthru
      _
    // Predicated region
    $region86: #{tpu_custom_call.1} parent=1 // pred_check
      _
    $region87: #{tpu_custom_call.1} parent=1 // pred_check_branch
      %593 = sbr.rel (0) target = $region89
    $region88: #{tpu_custom_call.1} parent=1 // pred_region
      %594 = dma.done [#allocation5], 128
    $region89: #{tpu_custom_call.1} parent=1 // pred_fallthru
      _
    %595 = vsyncpa [#allocation4], 1
    %596 = vsyncpa [#allocation7], 1
    %597 = vsyncpa [#allocation10], 1
    %598 = vsyncpa [#allocation13], 1
    %599 = vsyncpa [#allocation5], 1

// kernel: tpu_custom_call.1
$region0: #{tpu_custom_call.1}
  #allocation0 [shape = 'u32[]', space=smem, size = 0x4, offset = 0x4, fixed_abs, tag = 'smem constant byte address 0x4 - core index']
  #allocation1 [shape = 'u32[144,128]{1,0:T(1,128)}', space=vmem, size = 0x12000, scoped, tag = 'internal scratch']
  #allocation2 [shape = 'f32[8,32]{1,0:T(8,128)}', space=vmem, size = 0x1000, scoped, tag = 'scratch operand']
  %s0 = inlined_call_operand.hbm [shape: f32[16,16], index: 0, kind: input, shape index: {}]
  %s1 = inlined_call_operand.hbm [shape: f32[16,32], index: 1, kind: input, shape index: {}]
  %s2 = inlined_call_operand.hbm [shape: f32[16,32], index: 2, kind: input, shape index: {}]
  %s3 = inlined_call_operand.hbm [shape: f32[32,128], index: 3, kind: input, shape index: {}]
  %s4 = inlined_call_operand.hbm [shape: f32[32,128], index: 4, kind: input, shape index: {}]
  %s5 = inlined_call_operand.vmem [shape: f32[1,128], index: 5, kind: input, shape index: {}]
  %s6 = inlined_call_operand.hbm [shape: f32[128,128], index: 6, kind: input, shape index: {}]
  %s7 = inlined_call_operand.vmem [shape: f32[1,128], index: 7, kind: input, shape index: {}]
  %s8 = inlined_call_operand.vmem [shape: f32[1,128], index: 8, kind: input, shape index: {}]
  %s9 = inlined_call_operand.hbm [shape: f32[128,128], index: 9, kind: input, shape index: {}]
  %s10 = inlined_call_operand.vmem [shape: f32[1,128], index: 10, kind: input, shape index: {}]
  %s11 = inlined_call_operand.hbm [shape: f32[8,128], index: 11, kind: output, shape index: {}]
  %s12 = sld [smem:[#allocation0]]
  $region90: #{tpu_custom_call.1} parent=0
    _
  %s14 = ssub.s32 1, %s12
  %s15 = scalar_select 0, %s14, %s12
  $region1: #{tpu_custom_call.1} parent=0
    #allocation3 [shape = 'u8[4096]{0}', space=vmem, size = 0x1000, scoped, tag = 'input window, operand 0, single buffered']
    #allocation4 [shape = 's32[1]{0}', space=sflag, size = 0x4, scoped, tag = 'scoped memory for tpu_custom_call.1']
    #allocation5 [shape = 's32[1]{0}', space=sflag, size = 0x4, scoped, tag = 'scoped memory for tpu_custom_call.1']
    #allocation6 [shape = 'u8[8192]{0}', space=vmem, size = 0x2000, scoped, tag = 'input window, operand 1, single buffered']
    #allocation7 [shape = 's32[1]{0}', space=sflag, size = 0x4, scoped, tag = 'scoped memory for tpu_custom_call.1']
    #allocation8 [shape = 'u8[4096]{0}', space=vmem, size = 0x1000, scoped, tag = 'input window, operand 2, single buffered']
    #allocation9 [shape = 'u8[16384]{0}', space=vmem, size = 0x4000, scoped, tag = 'input window, operand 3, single buffered']
    #allocation10 [shape = 's32[1]{0}', space=sflag, size = 0x4, scoped, tag = 'scoped memory for tpu_custom_call.1']
    #allocation11 [shape = 'u8[16384]{0}', space=vmem, size = 0x4000, scoped, tag = 'input window, operand 4, single buffered']
    #allocation12 [shape = 'u8[65536]{0}', space=vmem, size = 0x10000, scoped, tag = 'input window, operand 6, single buffered']
    #allocation13 [shape = 's32[1]{0}', space=sflag, size = 0x4, scoped, tag = 'scoped memory for tpu_custom_call.1']
    #allocation14 [shape = 'u8[65536]{0}', space=vmem, size = 0x10000, scoped, tag = 'input window, operand 9, single buffered']
    #allocation15 [shape = 'u8[4096]{0}', space=vmem, size = 0x1000, scoped, tag = 'output window, operand 0, single buffered']
    %16 = vsyncpa [#allocation4], 0
    %17 = vsyncpa [#allocation7], 0
    %18 = vsyncpa [#allocation10], 0
    %19 = vsyncpa [#allocation13], 0
    %20 = vsyncpa [#allocation5], 0
    // Predicated region
    $region2: #{tpu_custom_call.1} parent=1 // pred_check
      _
    $region3: #{tpu_custom_call.1} parent=1 // pred_check_branch
      %22 = sbr.rel (0) target = $region5
    $region4: #{tpu_custom_call.1} parent=1 // pred_region
      %s24 = ssub.s32 128, 128
      %25 = vsyncadd [#allocation4], %s24
      %s27 = sshll.u32 [#allocation3], 4
      %s28 = int_to_ptr.vmem [resolvable:$true] %s27
      %30 = dma.hbm_to_vmem [thread:$0]  %s0, 128, %s28, [#allocation4]
    $region5: #{tpu_custom_call.1} parent=1 // pred_fallthru
      _
    // Predicated region
    $region6: #{tpu_custom_call.1} parent=1 // pred_check
      _
    $region7: #{tpu_custom_call.1} parent=1 // pred_check_branch
      %32 = sbr.rel (0) target = $region9
    $region8: #{tpu_custom_call.1} parent=1 // pred_region
      %s34 = ssub.s32 256, 256
      %35 = vsyncadd [#allocation7], %s34
      %s36 = sshll.u32 [#allocation6], 4
      %s37 = int_to_ptr.vmem [resolvable:$true] %s36
      %42 = dma.hbm_to_vmem [thread:$0]  %s1, 256, %s37, [#allocation7], 128, 128, 8
    $region9: #{tpu_custom_call.1} parent=1 // pred_fallthru
      _
    // Predicated region
    $region10: #{tpu_custom_call.1} parent=1 // pred_check
      _
    $region11: #{tpu_custom_call.1} parent=1 // pred_check_branch
      %44 = sbr.rel (0) target = $region13
    $region12: #{tpu_custom_call.1} parent=1 // pred_region
      %s46 = ssub.s32 128, 128
      %47 = vsyncadd [#allocation7], %s46
      %s49 = sshll.u32 [#allocation8], 4
      %s50 = int_to_ptr.vmem [resolvable:$true] %s49
      %52 = dma.hbm_to_vmem [thread:$0]  %s2, 128, %s50, [#allocation7]
    $region13: #{tpu_custom_call.1} parent=1 // pred_fallthru
      _
    // Predicated region
    $region14: #{tpu_custom_call.1} parent=1 // pred_check
      _
    $region15: #{tpu_custom_call.1} parent=1 // pred_check_branch
      %54 = sbr.rel (0) target = $region17
    $region16: #{tpu_custom_call.1} parent=1 // pred_region
      %s56 = ssub.s32 512, 512
      %57 = vsyncadd [#allocation10], %s56
      %s58 = sshll.u32 [#allocation9], 4
      %s59 = int_to_ptr.vmem [resolvable:$true] %s58
      %64 = dma.hbm_to_vmem [thread:$0]  %s3, 512, %s59, [#allocation10], 128, 128, 8
    $region17: #{tpu_custom_call.1} parent=1 // pred_fallthru
      _
    // Predicated region
    $region18: #{tpu_custom_call.1} parent=1 // pred_check
      _
    $region19: #{tpu_custom_call.1} parent=1 // pred_check_branch
      %66 = sbr.rel (0) target = $region21
    $region20: #{tpu_custom_call.1} parent=1 // pred_region
      %s68 = ssub.s32 512, 512
      %69 = vsyncadd [#allocation10], %s68
      %s70 = sshll.u32 [#allocation11], 4
      %s71 = int_to_ptr.vmem [resolvable:$true] %s70
      %76 = dma.hbm_to_vmem [thread:$0]  %s4, 512, %s71, [#allocation10], 128, 128, 8
    $region21: #{tpu_custom_call.1} parent=1 // pred_fallthru
      _
    // Predicated region
    $region22: #{tpu_custom_call.1} parent=1 // pred_check
      _
    $region23: #{tpu_custom_call.1} parent=1 // pred_check_branch
      %78 = sbr.rel (0) target = $region25
    $region24: #{tpu_custom_call.1} parent=1 // pred_region
      _
    $region25: #{tpu_custom_call.1} parent=1 // pred_fallthru
      _
    // Predicated region
    $region26: #{tpu_custom_call.1} parent=1 // pred_check
      _
    $region27: #{tpu_custom_call.1} parent=1 // pred_check_branch
      %80 = sbr.rel (0) target = $region29
    $region28: #{tpu_custom_call.1} parent=1 // pred_region
      %s82 = ssub.s32 2048, 2048
      %83 = vsyncadd [#allocation13], %s82
      %s84 = sshll.u32 [#allocation12], 4
      %s85 = int_to_ptr.vmem [resolvable:$true] %s84
      %90 = dma.hbm_to_vmem [thread:$0]  %s6, 2048, %s85, [#allocation13], 128, 128, 8
    $region29: #{tpu_custom_call.1} parent=1 // pred_fallthru
      _
    // Predicated region
    $region30: #{tpu_custom_call.1} parent=1 // pred_check
      _
    $region31: #{tpu_custom_call.1} parent=1 // pred_check_branch
      %92 = sbr.rel (0) target = $region33
    $region32: #{tpu_custom_call.1} parent=1 // pred_region
      _
    $region33: #{tpu_custom_call.1} parent=1 // pred_fallthru
      _
    // Predicated region
    $region34: #{tpu_custom_call.1} parent=1 // pred_check
      _
    $region35: #{tpu_custom_call.1} parent=1 // pred_check_branch
      %94 = sbr.rel (0) target = $region37
    $region36: #{tpu_custom_call.1} parent=1 // pred_region
      _
    $region37: #{tpu_custom_call.1} parent=1 // pred_fallthru
      _
    // Predicated region
    $region38: #{tpu_custom_call.1} parent=1 // pred_check
      _
    $region39: #{tpu_custom_call.1} parent=1 // pred_check_branch
      %96 = sbr.rel (0) target = $region41
    $region40: #{tpu_custom_call.1} parent=1 // pred_region
      %s98 = ssub.s32 2048, 2048
      %99 = vsyncadd [#allocation13], %s98
      %s100 = sshll.u32 [#allocation14], 4
      %s101 = int_to_ptr.vmem [resolvable:$true] %s100
      %106 = dma.hbm_to_vmem [thread:$0]  %s9, 2048, %s101, [#allocation13], 128, 128, 8
    $region41: #{tpu_custom_call.1} parent=1 // pred_fallthru
      _
    // Predicated region
    $region42: #{tpu_custom_call.1} parent=1 // pred_check
      _
    $region43: #{tpu_custom_call.1} parent=1 // pred_check_branch
      %108 = sbr.rel (0) target = $region45
    $region44: #{tpu_custom_call.1} parent=1 // pred_region
      _
    $region45: #{tpu_custom_call.1} parent=1 // pred_fallthru
      _
    // Predicated region
    $region46: #{tpu_custom_call.1} parent=1 // pred_check
      _
    $region47: #{tpu_custom_call.1} parent=1 // pred_check_branch
      %110 = sbr.rel (0) target = $region49
    $region48: #{tpu_custom_call.1} parent=1 // pred_region
      %111 = dma.done [#allocation4], 128
    $region49: #{tpu_custom_call.1} parent=1 // pred_fallthru
      _
    // Predicated region
    $region50: #{tpu_custom_call.1} parent=1 // pred_check
      _
    $region51: #{tpu_custom_call.1} parent=1 // pred_check_branch
      %113 = sbr.rel (0) target = $region53
    $region52: #{tpu_custom_call.1} parent=1 // pred_region
      %114 = dma.done [#allocation7], 256
    $region53: #{tpu_custom_call.1} parent=1 // pred_fallthru
      _
    // Predicated region
    $region54: #{tpu_custom_call.1} parent=1 // pred_check
      _
    $region55: #{tpu_custom_call.1} parent=1 // pred_check_branch
      %116 = sbr.rel (0) target = $region57
    $region56: #{tpu_custom_call.1} parent=1 // pred_region
      %117 = dma.done [#allocation7], 128
    $region57: #{tpu_custom_call.1} parent=1 // pred_fallthru
      _
    // Predicated region
    $region58: #{tpu_custom_call.1} parent=1 // pred_check
      _
    $region59: #{tpu_custom_call.1} parent=1 // pred_check_branch
      %119 = sbr.rel (0) target = $region61
    $region60: #{tpu_custom_call.1} parent=1 // pred_region
      %120 = dma.done [#allocation10], 512
    $region61: #{tpu_custom_call.1} parent=1 // pred_fallthru
      _
    // Predicated region
    $region62: #{tpu_custom_call.1} parent=1 // pred_check
      _
    $region63: #{tpu_custom_call.1} parent=1 // pred_check_branch
      %122 = sbr.rel (0) target = $region65
    $region64: #{tpu_custom_call.1} parent=1 // pred_region
      %123 = dma.done [#allocation10], 512
    $region65: #{tpu_custom_call.1} parent=1 // pred_fallthru
      _
    // Predicated region
    $region66: #{tpu_custom_call.1} parent=1 // pred_check
      _
    $region67: #{tpu_custom_call.1} parent=1 // pred_check_branch
      %125 = sbr.rel (0) target = $region69
    $region68: #{tpu_custom_call.1} parent=1 // pred_region
      %126 = dma.done [#allocation13], 2048
    $region69: #{tpu_custom_call.1} parent=1 // pred_fallthru
      _
    // Predicated region
    $region70: #{tpu_custom_call.1} parent=1 // pred_check
      _
    $region71: #{tpu_custom_call.1} parent=1 // pred_check_branch
      %128 = sbr.rel (0) target = $region73
    $region72: #{tpu_custom_call.1} parent=1 // pred_region
      %129 = dma.done [#allocation13], 2048
    $region73: #{tpu_custom_call.1} parent=1 // pred_fallthru
      _
    %p130 = scmp.eq.s32.totalorder 0, 0
    // Predicated region
    $region74: #{tpu_custom_call.1} parent=1 // pred_check
      %p131 = pneg %p130
    $region75: #{tpu_custom_call.1} parent=1 // pred_check_branch
      %133 = sbr.rel (%p131) target = $region77
    $region76: #{tpu_custom_call.1} parent=1 // pred_region
      %vm134 = vcmask 261120
      %135 = vst.msk [vmem:[#allocation2] sm:$0xff] %vm134, 0.0
    $region77: #{tpu_custom_call.1} parent=1 // pred_fallthru
      _
    %v136 = vld [vmem:[#allocation3] sm:$0xff]
    %v137 = vld [vmem:[#allocation6] sm:$0xff]
    %v138 = vld [vmem:[#allocation6 + $0x8] sm:$0xff]
    %v139 = vld [vmem:[#allocation2] sm:$0xff]
    %vm140 = vcmask 130048
    %v142 = vsel %vm140, %v136, 0
    %144 = vmatprep.subr.mxu0 0.0
    %145 = vmatpush1.msra.mxu0 0.0
    %146 = vmatprep.subr.mxu0 0.0
    %147 = vmatpush1.msra.mxu0 0.0
    %148 = vmatprep.subr.mxu0 0.0
    %149 = vmatpush1.msra.mxu0 0.0
    %150 = vmatprep.subr.mxu0 0.0
    %151 = vmatpush1.msra.mxu0 0.0
    %152 = vmatprep.subr.mxu0 0.0
    %153 = vmatpush1.msra.mxu0 0.0
    %154 = vmatprep.subr.mxu0 0.0
    %155 = vmatpush1.msra.mxu0 0.0
    %156 = vmatprep.subr.mxu0 0.0
    %157 = vmatpush1.msra.mxu0 0.0
    %158 = vmatprep.subr.mxu0 0.0
    %159 = vmatpush1.msra.mxu0 0.0
    %160 = vmatprep.subr.mxu0 0.0
    %161 = vmatpush1.msra.mxu0 0.0
    %162 = vmatprep.subr.mxu0 0.0
    %163 = vmatpush1.msra.mxu0 0.0
    %164 = vmatprep.subr.mxu0 0.0
    %165 = vmatpush1.msra.mxu0 0.0
    %166 = vmatprep.subr.mxu0 0.0
    %167 = vmatpush1.msra.mxu0 0.0
    %168 = vmatprep.subr.mxu0 0.0
    %169 = vmatpush1.msra.mxu0 0.0
    %170 = vmatprep.subr.mxu0 0.0
    %171 = vmatpush1.msra.mxu0 0.0
    %172 = vmatprep.subr.mxu0 0.0
    %173 = vmatpush1.msra.mxu0 %v138
    %174 = vmatprep.subr.mxu0 0.0
    %175 = vmatpush1.msra.mxu0 %v137
    %176 = vmatprep.subr.mxu0 0.0
    %177 = vmatpush2.msra.mxu0 0.0
    %178 = vmatprep.subr.mxu0 0.0
    %179 = vmatpush2.msra.mxu0 0.0
    %180 = vmatprep.subr.mxu0 0.0
    %181 = vmatpush2.msra.mxu0 0.0
    %182 = vmatprep.subr.mxu0 0.0
    %183 = vmatpush2.msra.mxu0 0.0
    %184 = vmatprep.subr.mxu0 0.0
    %185 = vmatpush2.msra.mxu0 0.0
    %186 = vmatprep.subr.mxu0 0.0
    %187 = vmatpush2.msra.mxu0 0.0
    %188 = vmatprep.subr.mxu0 0.0
    %189 = vmatpush2.msra.mxu0 0.0
    %190 = vmatprep.subr.mxu0 0.0
    %191 = vmatpush2.msra.mxu0 0.0
    %192 = vmatprep.subr.mxu0 0.0
    %193 = vmatpush2.msra.mxu0 0.0
    %194 = vmatprep.subr.mxu0 0.0
    %195 = vmatpush2.msra.mxu0 0.0
    %196 = vmatprep.subr.mxu0 0.0
    %197 = vmatpush2.msra.mxu0 0.0
    %198 = vmatprep.subr.mxu0 0.0
    %199 = vmatpush2.msra.mxu0 0.0
    %200 = vmatprep.subr.mxu0 0.0
    %201 = vmatpush2.msra.mxu0 0.0
    %202 = vmatprep.subr.mxu0 0.0
    %203 = vmatpush2.msra.mxu0 0.0
    %204 = vmatprep.subr.mxu0 0.0
    %205 = vmatpush2.msra.mxu0 0.0
    %206 = vmatprep.subr.mxu0 0.0
    %207 = vmatpush2.msra.mxu0 0.0
    %208 = vmatprep.mubr.f32.mxu0 0.0
    %209 = vmatmul.mubr.f32.gmra.mxu0 %v142
    %v210 = vpop.f32.mrf.mxu0
    %v211 = vadd.f32 0.0, %v210
    %v212 = vpop.f32.mrf.mxu0
    %213 = vdwg.mxu0
    %v214 = vadd.f32 %v139, %v211
    %vm215 = vcmask 261120
    %216 = vst.msk [vmem:[#allocation2] sm:$0xff] %vm215, %v214
    // Predicated region
    $region78: #{tpu_custom_call.1} parent=1 // pred_check
      %p217 = pneg %p130
    $region79: #{tpu_custom_call.1} parent=1 // pred_check_branch
      %219 = sbr.rel (%p217) target = $region81
    $region80: #{tpu_custom_call.1} parent=1 // pred_region
      %v220 = vld [vmem:[#allocation8] sm:$0xff]
      %v221 = vld [vmem:[#allocation9] sm:$0xff]
      %v222 = vld [vmem:[#allocation9 + $0x8] sm:$0xff]
      %v223 = vld [vmem:[#allocation9 + $0x10] sm:$0xff]
      %v224 = vld [vmem:[#allocation9 + $0x18] sm:$0xff]
      %v225 = vld [vmem:[#allocation2] sm:$0xff]
      %v226 = vld [vmem:[#allocation11] sm:$0xff]
      %v227 = vld [vmem:[#allocation11 + $0x8] sm:$0xff]
      %v228 = vld [vmem:[#allocation11 + $0x10] sm:$0xff]
      %v229 = vld [vmem:[#allocation11 + $0x18] sm:$0xff]
      %v231 = vsel %vm215, %v225, 0
      %233 = vmatprep.subr.mxu0 0.0
      %234 = vmatpush1.msra.mxu0 0.0
      %235 = vmatprep.subr.mxu0 0.0
      %236 = vmatpush1.msra.mxu0 0.0
      %237 = vmatprep.subr.mxu0 0.0
      %238 = vmatpush1.msra.mxu0 0.0
      %239 = vmatprep.subr.mxu0 0.0
      %240 = vmatpush1.msra.mxu0 0.0
      %241 = vmatprep.subr.mxu0 0.0
      %242 = vmatpush1.msra.mxu0 0.0
      %243 = vmatprep.subr.mxu0 0.0
      %244 = vmatpush1.msra.mxu0 0.0
      %245 = vmatprep.subr.mxu0 0.0
      %246 = vmatpush1.msra.mxu0 0.0
      %247 = vmatprep.subr.mxu0 0.0
      %248 = vmatpush1.msra.mxu0 0.0
      %249 = vmatprep.subr.mxu0 0.0
      %250 = vmatpush1.msra.mxu0 0.0
      %251 = vmatprep.subr.mxu0 0.0
      %252 = vmatpush1.msra.mxu0 0.0
      %253 = vmatprep.subr.mxu0 0.0
      %254 = vmatpush1.msra.mxu0 0.0
      %255 = vmatprep.subr.mxu0 0.0
      %256 = vmatpush1.msra.mxu0 0.0
      %257 = vmatprep.subr.mxu0 0.0
      %258 = vmatpush1.msra.mxu0 %v229
      %259 = vmatprep.subr.mxu0 0.0
      %260 = vmatpush1.msra.mxu0 %v228
      %261 = vmatprep.subr.mxu0 0.0
      %262 = vmatpush1.msra.mxu0 %v227
      %263 = vmatprep.subr.mxu0 0.0
      %264 = vmatpush1.msra.mxu0 %v226
      %265 = vmatprep.subr.mxu0 0.0
      %266 = vmatpush2.msra.mxu0 0.0
      %267 = vmatprep.subr.mxu0 0.0
      %268 = vmatpush2.msra.mxu0 0.0
      %269 = vmatprep.subr.mxu0 0.0
      %270 = vmatpush2.msra.mxu0 0.0
      %271 = vmatprep.subr.mxu0 0.0
      %272 = vmatpush2.msra.mxu0 0.0
      %273 = vmatprep.subr.mxu0 0.0
      %274 = vmatpush2.msra.mxu0 0.0
      %275 = vmatprep.subr.mxu0 0.0
      %276 = vmatpush2.msra.mxu0 0.0
      %277 = vmatprep.subr.mxu0 0.0
      %278 = vmatpush2.msra.mxu0 0.0
      %279 = vmatprep.subr.mxu0 0.0
      %280 = vmatpush2.msra.mxu0 0.0
      %281 = vmatprep.subr.mxu0 0.0
      %282 = vmatpush2.msra.mxu0 0.0
      %283 = vmatprep.subr.mxu0 0.0
      %284 = vmatpush2.msra.mxu0 0.0
      %285 = vmatprep.subr.mxu0 0.0
      %286 = vmatpush2.msra.mxu0 0.0
      %287 = vmatprep.subr.mxu0 0.0
      %288 = vmatpush2.msra.mxu0 0.0
      %289 = vmatprep.subr.mxu0 0.0
      %290 = vmatpush2.msra.mxu0 0.0
      %291 = vmatprep.subr.mxu0 0.0
      %292 = vmatpush2.msra.mxu0 0.0
      %293 = vmatprep.subr.mxu0 0.0
      %294 = vmatpush2.msra.mxu0 0.0
      %295 = vmatprep.subr.mxu0 0.0
      %296 = vmatpush2.msra.mxu0 0.0
      %297 = vmatprep.mubr.f32.mxu0 0.0
      %298 = vmatmul.mubr.f32.gmra.mxu0 %v231
      %v299 = vpop.f32.mrf.mxu0
      %v300 = vadd.f32 0.0, %v299
      %v301 = vpop.f32.mrf.mxu0
      %302 = vdwg.mxu0
      %v304 = vsel %vm215, %v220, 0
      %306 = vmatprep.subr.mxu0 0.0
      %307 = vmatpush1.msra.mxu0 0.0
      %308 = vmatprep.subr.mxu0 0.0
      %309 = vmatpush1.msra.mxu0 0.0
      %310 = vmatprep.subr.mxu0 0.0
      %311 = vmatpush1.msra.mxu0 0.0
      %312 = vmatprep.subr.mxu0 0.0
      %313 = vmatpush1.msra.mxu0 0.0
      %314 = vmatprep.subr.mxu0 0.0
      %315 = vmatpush1.msra.mxu0 0.0
      %316 = vmatprep.subr.mxu0 0.0
      %317 = vmatpush1.msra.mxu0 0.0
      %318 = vmatprep.subr.mxu0 0.0
      %319 = vmatpush1.msra.mxu0 0.0
      %320 = vmatprep.subr.mxu0 0.0
      %321 = vmatpush1.msra.mxu0 0.0
      %322 = vmatprep.subr.mxu0 0.0
      %323 = vmatpush1.msra.mxu0 0.0
      %324 = vmatprep.subr.mxu0 0.0
      %325 = vmatpush1.msra.mxu0 0.0
      %326 = vmatprep.subr.mxu0 0.0
      %327 = vmatpush1.msra.mxu0 0.0
      %328 = vmatprep.subr.mxu0 0.0
      %329 = vmatpush1.msra.mxu0 0.0
      %330 = vmatprep.subr.mxu0 0.0
      %331 = vmatpush1.msra.mxu0 %v224
      %332 = vmatprep.subr.mxu0 0.0
      %333 = vmatpush1.msra.mxu0 %v223
      %334 = vmatprep.subr.mxu0 0.0
      %335 = vmatpush1.msra.mxu0 %v222
      %336 = vmatprep.subr.mxu0 0.0
      %337 = vmatpush1.msra.mxu0 %v221
      %338 = vmatprep.subr.mxu0 0.0
      %339 = vmatpush2.msra.mxu0 0.0
      %340 = vmatprep.subr.mxu0 0.0
      %341 = vmatpush2.msra.mxu0 0.0
      %342 = vmatprep.subr.mxu0 0.0
      %343 = vmatpush2.msra.mxu0 0.0
      %344 = vmatprep.subr.mxu0 0.0
      %345 = vmatpush2.msra.mxu0 0.0
      %346 = vmatprep.subr.mxu0 0.0
      %347 = vmatpush2.msra.mxu0 0.0
      %348 = vmatprep.subr.mxu0 0.0
      %349 = vmatpush2.msra.mxu0 0.0
      %350 = vmatprep.subr.mxu0 0.0
      %351 = vmatpush2.msra.mxu0 0.0
      %352 = vmatprep.subr.mxu0 0.0
      %353 = vmatpush2.msra.mxu0 0.0
      %354 = vmatprep.subr.mxu0 0.0
      %355 = vmatpush2.msra.mxu0 0.0
      %356 = vmatprep.subr.mxu0 0.0
      %357 = vmatpush2.msra.mxu0 0.0
      %358 = vmatprep.subr.mxu0 0.0
      %359 = vmatpush2.msra.mxu0 0.0
      %360 = vmatprep.subr.mxu0 0.0
      %361 = vmatpush2.msra.mxu0 0.0
      %362 = vmatprep.subr.mxu0 0.0
      %363 = vmatpush2.msra.mxu0 0.0
      %364 = vmatprep.subr.mxu0 0.0
      %365 = vmatpush2.msra.mxu0 0.0
      %366 = vmatprep.subr.mxu0 0.0
      %367 = vmatpush2.msra.mxu0 0.0
      %368 = vmatprep.subr.mxu0 0.0
      %369 = vmatpush2.msra.mxu0 0.0
      %370 = vmatprep.mubr.f32.mxu0 0.0
      %371 = vmatmul.mubr.f32.gmra.mxu0 %v304
      %v372 = vpop.f32.mrf.mxu0
      %v373 = vadd.f32 %v300, %v372
      %v374 = vpop.f32.mrf.mxu0
      %375 = vdwg.mxu0
      %v376 = vld [vmem:[%s5] sm:$0x1]
      %v378 = vlaneseq
      %v379 = vshrl.u32 %v378, 7
      %v380 = vsub.s32 0, %v379
      %v381 = vrot.slane %v376, %v380
      %v383 = vadd.f32 %v373, %v381
      %v384 = vmax.f32 %v383, 0.0
      %v385 = vld [vmem:[#allocation12] sm:$0xff]
      %v386 = vld [vmem:[#allocation12 + $0x8] sm:$0xff]
      %v387 = vld [vmem:[#allocation12 + $0x10] sm:$0xff]
      %v388 = vld [vmem:[#allocation12 + $0x18] sm:$0xff]
      %v389 = vld [vmem:[#allocation12 + $0x20] sm:$0xff]
      %v390 = vld [vmem:[#allocation12 + $0x28] sm:$0xff]
      %v391 = vld [vmem:[#allocation12 + $0x30] sm:$0xff]
      %v392 = vld [vmem:[#allocation12 + $0x38] sm:$0xff]
      %v393 = vld [vmem:[#allocation12 + $0x40] sm:$0xff]
      %v394 = vld [vmem:[#allocation12 + $0x48] sm:$0xff]
      %v395 = vld [vmem:[#allocation12 + $0x50] sm:$0xff]
      %v396 = vld [vmem:[#allocation12 + $0x58] sm:$0xff]
      %v397 = vld [vmem:[#allocation12 + $0x60] sm:$0xff]
      %v398 = vld [vmem:[#allocation12 + $0x68] sm:$0xff]
      %v399 = vld [vmem:[#allocation12 + $0x70] sm:$0xff]
      %v400 = vld [vmem:[#allocation12 + $0x78] sm:$0xff]
      %v401 = vld [vmem:[%s7] sm:$0x1]
      %v403 = vlaneseq
      %v404 = vshrl.u32 %v403, 7
      %v405 = vsub.s32 0, %v404
      %v406 = vrot.slane %v401, %v405
      %408 = vmatprep.subr.mxu0 0.0
      %409 = vmatpush1.msra.mxu0 %v400
      %410 = vmatprep.subr.mxu0 0.0
      %411 = vmatpush1.msra.mxu0 %v399
      %412 = vmatprep.subr.mxu0 0.0
      %413 = vmatpush1.msra.mxu0 %v398
      %414 = vmatprep.subr.mxu0 0.0
      %415 = vmatpush1.msra.mxu0 %v397
      %416 = vmatprep.subr.mxu0 0.0
      %417 = vmatpush1.msra.mxu0 %v396
      %418 = vmatprep.subr.mxu0 0.0
      %419 = vmatpush1.msra.mxu0 %v395
      %420 = vmatprep.subr.mxu0 0.0
      %421 = vmatpush1.msra.mxu0 %v394
      %422 = vmatprep.subr.mxu0 0.0
      %423 = vmatpush1.msra.mxu0 %v393
      %424 = vmatprep.subr.mxu0 0.0
      %425 = vmatpush1.msra.mxu0 %v392
      %426 = vmatprep.subr.mxu0 0.0
      %427 = vmatpush1.msra.mxu0 %v391
      %428 = vmatprep.subr.mxu0 0.0
      %429 = vmatpush1.msra.mxu0 %v390
      %430 = vmatprep.subr.mxu0 0.0
      %431 = vmatpush1.msra.mxu0 %v389
      %432 = vmatprep.subr.mxu0 0.0
      %433 = vmatpush1.msra.mxu0 %v388
      %434 = vmatprep.subr.mxu0 0.0
      %435 = vmatpush1.msra.mxu0 %v387
      %436 = vmatprep.subr.mxu0 0.0
      %437 = vmatpush1.msra.mxu0 %v386
      %438 = vmatprep.subr.mxu0 0.0
      %439 = vmatpush1.msra.mxu0 %v385
      %440 = vmatprep.subr.mxu0 0.0
      %441 = vmatpush2.msra.mxu0 0.0
      %442 = vmatprep.subr.mxu0 0.0
      %443 = vmatpush2.msra.mxu0 0.0
      %444 = vmatprep.subr.mxu0 0.0
      %445 = vmatpush2.msra.mxu0 0.0
      %446 = vmatprep.subr.mxu0 0.0
      %447 = vmatpush2.msra.mxu0 0.0
      %448 = vmatprep.subr.mxu0 0.0
      %449 = vmatpush2.msra.mxu0 0.0
      %450 = vmatprep.subr.mxu0 0.0
      %451 = vmatpush2.msra.mxu0 0.0
      %452 = vmatprep.subr.mxu0 0.0
      %453 = vmatpush2.msra.mxu0 0.0
      %454 = vmatprep.subr.mxu0 0.0
      %455 = vmatpush2.msra.mxu0 0.0
      %456 = vmatprep.subr.mxu0 0.0
      %457 = vmatpush2.msra.mxu0 0.0
      %458 = vmatprep.subr.mxu0 0.0
      %459 = vmatpush2.msra.mxu0 0.0
      %460 = vmatprep.subr.mxu0 0.0
      %461 = vmatpush2.msra.mxu0 0.0
      %462 = vmatprep.subr.mxu0 0.0
      %463 = vmatpush2.msra.mxu0 0.0
      %464 = vmatprep.subr.mxu0 0.0
      %465 = vmatpush2.msra.mxu0 0.0
      %466 = vmatprep.subr.mxu0 0.0
      %467 = vmatpush2.msra.mxu0 0.0
      %468 = vmatprep.subr.mxu0 0.0
      %469 = vmatpush2.msra.mxu0 0.0
      %470 = vmatprep.subr.mxu0 0.0
      %471 = vmatpush2.msra.mxu0 0.0
      %472 = vmatprep.mubr.f32.mxu0 0.0
      %473 = vmatmul.mubr.f32.gmra.mxu0 %v384
      %v474 = vpop.f32.mrf.mxu0
      %v475 = vadd.f32 %v406, %v474
      %v476 = vpop.f32.mrf.mxu0
      %477 = vdwg.mxu0
      %v478 = vld [vmem:[%s8] sm:$0x1]
      %vm479 = vcmp.gt.f32.partialorder %v475, 0.0
      %v481 = vlaneseq
      %v482 = vshrl.u32 %v481, 7
      %v483 = vsub.s32 0, %v482
      %v484 = vrot.slane %v478, %v483
      %v486 = vmul.f32 %v484, %v475
      %v487 = vsel %vm479, %v475, %v486
      %v488 = vld [vmem:[#allocation14] sm:$0xff]
      %v489 = vld [vmem:[#allocation14 + $0x8] sm:$0xff]
      %v490 = vld [vmem:[#allocation14 + $0x10] sm:$0xff]
      %v491 = vld [vmem:[#allocation14 + $0x18] sm:$0xff]
      %v492 = vld [vmem:[#allocation14 + $0x20] sm:$0xff]
      %v493 = vld [vmem:[#allocation14 + $0x28] sm:$0xff]
      %v494 = vld [vmem:[#allocation14 + $0x30] sm:$0xff]
      %v495 = vld [vmem:[#allocation14 + $0x38] sm:$0xff]
      %v496 = vld [vmem:[#allocation14 + $0x40] sm:$0xff]
      %v497 = vld [vmem:[#allocation14 + $0x48] sm:$0xff]
      %v498 = vld [vmem:[#allocation14 + $0x50] sm:$0xff]
      %v499 = vld [vmem:[#allocation14 + $0x58] sm:$0xff]
      %v500 = vld [vmem:[#allocation14 + $0x60] sm:$0xff]
      %v501 = vld [vmem:[#allocation14 + $0x68] sm:$0xff]
      %v502 = vld [vmem:[#allocation14 + $0x70] sm:$0xff]
      %v503 = vld [vmem:[#allocation14 + $0x78] sm:$0xff]
      %v504 = vld [vmem:[%s10] sm:$0x1]
      %v506 = vlaneseq
      %v507 = vshrl.u32 %v506, 7
      %v508 = vsub.s32 0, %v507
      %v509 = vrot.slane %v504, %v508
      %511 = vmatprep.subr.mxu0 0.0
      %512 = vmatpush1.msra.mxu0 %v503
      %513 = vmatprep.subr.mxu0 0.0
      %514 = vmatpush1.msra.mxu0 %v502
      %515 = vmatprep.subr.mxu0 0.0
      %516 = vmatpush1.msra.mxu0 %v501
      %517 = vmatprep.subr.mxu0 0.0
      %518 = vmatpush1.msra.mxu0 %v500
      %519 = vmatprep.subr.mxu0 0.0
      %520 = vmatpush1.msra.mxu0 %v499
      %521 = vmatprep.subr.mxu0 0.0
      %522 = vmatpush1.msra.mxu0 %v498
      %523 = vmatprep.subr.mxu0 0.0
      %524 = vmatpush1.msra.mxu0 %v497
      %525 = vmatprep.subr.mxu0 0.0
      %526 = vmatpush1.msra.mxu0 %v496
      %527 = vmatprep.subr.mxu0 0.0
      %528 = vmatpush1.msra.mxu0 %v495
      %529 = vmatprep.subr.mxu0 0.0
      %530 = vmatpush1.msra.mxu0 %v494
      %531 = vmatprep.subr.mxu0 0.0
      %532 = vmatpush1.msra.mxu0 %v493
      %533 = vmatprep.subr.mxu0 0.0
      %534 = vmatpush1.msra.mxu0 %v492
      %535 = vmatprep.subr.mxu0 0.0
      %536 = vmatpush1.msra.mxu0 %v491
      %537 = vmatprep.subr.mxu0 0.0
      %538 = vmatpush1.msra.mxu0 %v490
      %539 = vmatprep.subr.mxu0 0.0
      %540 = vmatpush1.msra.mxu0 %v489
      %541 = vmatprep.subr.mxu0 0.0
      %542 = vmatpush1.msra.mxu0 %v488
      %543 = vmatprep.subr.mxu0 0.0
      %544 = vmatpush2.msra.mxu0 0.0
      %545 = vmatprep.subr.mxu0 0.0
      %546 = vmatpush2.msra.mxu0 0.0
      %547 = vmatprep.subr.mxu0 0.0
      %548 = vmatpush2.msra.mxu0 0.0
      %549 = vmatprep.subr.mxu0 0.0
      %550 = vmatpush2.msra.mxu0 0.0
      %551 = vmatprep.subr.mxu0 0.0
      %552 = vmatpush2.msra.mxu0 0.0
      %553 = vmatprep.subr.mxu0 0.0
      %554 = vmatpush2.msra.mxu0 0.0
      %555 = vmatprep.subr.mxu0 0.0
      %556 = vmatpush2.msra.mxu0 0.0
      %557 = vmatprep.subr.mxu0 0.0
      %558 = vmatpush2.msra.mxu0 0.0
      %559 = vmatprep.subr.mxu0 0.0
      %560 = vmatpush2.msra.mxu0 0.0
      %561 = vmatprep.subr.mxu0 0.0
      %562 = vmatpush2.msra.mxu0 0.0
      %563 = vmatprep.subr.mxu0 0.0
      %564 = vmatpush2.msra.mxu0 0.0
      %565 = vmatprep.subr.mxu0 0.0
      %566 = vmatpush2.msra.mxu0 0.0
      %567 = vmatprep.subr.mxu0 0.0
      %568 = vmatpush2.msra.mxu0 0.0
      %569 = vmatprep.subr.mxu0 0.0
      %570 = vmatpush2.msra.mxu0 0.0
      %571 = vmatprep.subr.mxu0 0.0
      %572 = vmatpush2.msra.mxu0 0.0
      %573 = vmatprep.subr.mxu0 0.0
      %574 = vmatpush2.msra.mxu0 0.0
      %575 = vmatprep.mubr.f32.mxu0 0.0
      %576 = vmatmul.mubr.f32.gmra.mxu0 %v487
      %v577 = vpop.f32.mrf.mxu0
      %v578 = vadd.f32 %v509, %v577
      %v579 = vpop.f32.mrf.mxu0
      %580 = vdwg.mxu0
      %581 = vst [vmem:[#allocation15] sm:$0xff] %v578
    $region81: #{tpu_custom_call.1} parent=1 // pred_fallthru
      _
    // Predicated region
    $region82: #{tpu_custom_call.1} parent=1 // pred_check
      _
    $region83: #{tpu_custom_call.1} parent=1 // pred_check_branch
      %583 = sbr.rel (0) target = $region85
    $region84: #{tpu_custom_call.1} parent=1 // pred_region
      %s585 = ssub.s32 128, 128
      %586 = vsyncadd [#allocation5], %s585
      %s588 = sshll.u32 [#allocation15], 4
      %s589 = int_to_ptr.vmem [resolvable:$true] %s588
      %591 = dma.vmem_to_hbm [thread:$0]  %s589, 128, %s11, [#allocation5]
    $region85: #{tpu_custom_call.1} parent=1 // pred_fallthru
      _
    // Predicated region
    $region86: #{tpu_custom_call.1} parent=1 // pred_check
      _
    $region87: #{tpu_custom_call.1} parent=1 // pred_check_branch
      %593 = sbr.rel (0) target = $region89
    $region88: #{tpu_custom_call.1} parent=1 // pred_region
      %594 = dma.done [#allocation5], 128
    $region89: #{tpu_custom_call.1} parent=1 // pred_fallthru
      _
    %595 = vsyncpa [#allocation4], 1
    %596 = vsyncpa [#allocation7], 1
    %597 = vsyncpa [#allocation10], 1
    %598 = vsyncpa [#allocation13], 1
    %599 = vsyncpa [#allocation5], 1

</llo_original>
